<compile_context>
chip_gen: v7x
topology: tpu7x:2x2x1
jax: 0.10.0
libtpu: 0.0.40
codegen_flags: <defaults>
</compile_context>

<pallas_src>
import jax
import jax.numpy as jnp
from jax.experimental import pallas as pl
from jax.experimental.pallas import tpu as pltpu

_BN_EPS = 1e-5
_LANE = 128


def _round_up(x, m):
    return (x + m - 1) // m * m


# ---------------- fused kernel (one full batch per grid step) ----------------

def _generator_kernel(x_ref,
                      w1_ref, g1_ref, be1_ref,
                      w2_ref, g2_ref, be2_ref,
                      w3_ref, g3_ref, be3_ref,
                      w4_ref, g4_ref, be4_ref,
                      w5_ref, b5_ref,
                      o_ref):
    def block(x_bf16, w_ref, gamma_ref, beta_ref):
        # Linear (bias folded away by BN train-mode batch stats); f32 accumulate.
        y = jnp.dot(x_bf16, w_ref[...], preferred_element_type=jnp.float32)
        # One-pass biased batch statistics (f32).
        mean = jnp.mean(y, axis=0, keepdims=True)            # (1, out)
        mean_sq = jnp.mean(y * y, axis=0, keepdims=True)     # (1, out)
        var = jnp.maximum(mean_sq - mean * mean, 0.0)
        scale = gamma_ref[...] * jax.lax.rsqrt(var + _BN_EPS)
        shift = beta_ref[...] - mean * scale
        # Single FMA + ReLU; emit bf16 to halve live activation bytes.
        return jnp.maximum(y * scale + shift, 0.0).astype(jnp.bfloat16)

    x = x_ref[...].astype(jnp.bfloat16)                      # (N, z_dim)
    x = block(x, w1_ref, g1_ref, be1_ref)
    x = block(x, w2_ref, g2_ref, be2_ref)
    x = block(x, w3_ref, g3_ref, be3_ref)
    x = block(x, w4_ref, g4_ref, be4_ref)

    y = jnp.dot(x, w5_ref[...], preferred_element_type=jnp.float32) + b5_ref[...]
    o_ref[...] = jnp.tanh(y).astype(o_ref.dtype)


# ---------------- wrapper ----------------

def generator_forward(params, noise):
    """noise: (batch, z_dim) or (num_batches, batch, z_dim).

    Each leading `num_batches` slice is an independent generator invocation
    (its own BatchNorm batch statistics), processed as one grid step with the
    weights pinned VMEM-resident across steps.
    """
    squeeze = noise.ndim == 2
    if squeeze:
        noise = noise[None]
    nb, n, zp = noise.shape
    blocks = params["blocks"]              # list of (w_bf16, gamma, beta)
    w5, b5 = params["final"]
    i_dim = w5.shape[1]
    assert zp == blocks[0][0].shape[0], "noise feature dim mismatch"
    # BN stats need the whole batch in ONE block: one grid step == one batch.
    if nb > 1 and n % 8 != 0:
        raise ValueError("per-batch rows must be a multiple of 8 when num_batches > 1")

    noise2d = noise.reshape(nb * n, zp)

    args = [noise2d]
    in_specs = [pl.BlockSpec((n, zp), lambda i: (i, 0))]
    flops = 0
    transcendentals = 0
    bytes_accessed = noise2d.size * noise2d.dtype.itemsize
    k = zp
    for (w, gamma, beta) in blocks:
        args += [w, gamma, beta]
        in_specs += [pl.BlockSpec(w.shape, lambda i: (0, 0)),       # pinned
                     pl.BlockSpec(gamma.shape, lambda i: (0, 0)),   # pinned
                     pl.BlockSpec(beta.shape, lambda i: (0, 0))]    # pinned
        flops += 2 * nb * n * k * w.shape[1]
        transcendentals += nb * w.shape[1]                           # rsqrt
        bytes_accessed += (w.size * w.dtype.itemsize
                           + gamma.size * 4 + beta.size * 4)
        k = w.shape[1]
    args += [w5, b5]
    in_specs += [pl.BlockSpec(w5.shape, lambda i: (0, 0)),
                 pl.BlockSpec(b5.shape, lambda i: (0, 0))]
    flops += 2 * nb * n * k * i_dim
    transcendentals += nb * n * i_dim                                # tanh
    bytes_accessed += w5.size * w5.dtype.itemsize + b5.size * 4
    bytes_accessed += nb * n * i_dim * 4

    out2d = pl.pallas_call(
        _generator_kernel,
        out_shape=jax.ShapeDtypeStruct((nb * n, i_dim), jnp.float32),
        grid=(nb,),
        in_specs=in_specs,
        out_specs=pl.BlockSpec((n, i_dim), lambda i: (i, 0)),
        cost_estimate=pl.CostEstimate(
            flops=flops,
            transcendentals=transcendentals,
            bytes_accessed=bytes_accessed),
        compiler_params=pltpu.CompilerParams(
            dimension_semantics=("parallel",),          # megacore on v7x
            # Per-step footprint ~1 MiB; stays far under v7x's 64 MiB VMEM.
            vmem_limit_bytes=32 * 1024 * 1024),
    )(*args)

    out = out2d.reshape(nb, n, i_dim)
    return out[0] if squeeze else out


# ------------- parameter init (PyTorch-style, deterministic, lane-padded) -------------

def _init_padded_linear(key, fan_in, fan_out, p_in, p_out, dtype):
    bound = 1.0 / jnp.sqrt(jnp.float32(fan_in))
    # Stored as (in, out), i.e. transposed PyTorch (out, in); pad rows/cols zeroed
    # so the padded network is mathematically identical to the unpadded one.
    w = jax.random.uniform(key, (p_in, p_out), jnp.float32, -bound, bound)
    row_mask = (jnp.arange(p_in) < fan_in)[:, None]
    col_mask = (jnp.arange(p_out) < fan_out)[None, :]
    w = jnp.where(row_mask & col_mask, w, 0.0)
    return w.astype(dtype)


def init_generator_params(key, z_dim, i_dim, h_dim):
    dims = [z_dim, h_dim, h_dim * 2, h_dim * 4, h_dim * 8, i_dim]
    # Hidden feature dims rounded up to 128 lanes (lane-dense vregs, full MXU tiles).
    pdims = [dims[0]] + [_round_up(d, _LANE) for d in dims[1:5]] + [dims[5]]
    keys = jax.random.split(key, 6)
    params = {"blocks": [], "final": None}
    for li in range(4):
        # Block linear bias dropped: BN training-mode batch stats cancel any
        # constant bias exactly, so the forward output is unchanged.
        w = _init_padded_linear(keys[li], dims[li], dims[li + 1],
                                pdims[li], pdims[li + 1], jnp.bfloat16)
        gamma = jnp.ones((1, pdims[li + 1]), jnp.float32)   # BN weight=1 (pad lanes -> 0 out)
        beta = jnp.zeros((1, pdims[li + 1]), jnp.float32)   # BN bias=0
        params["blocks"].append((w, gamma, beta))
    wf = _init_padded_linear(keys[4], dims[4], dims[5],
                             pdims[4], pdims[5], jnp.bfloat16)
    bound = 1.0 / jnp.sqrt(jnp.float32(dims[4]))
    bf = jax.random.uniform(keys[5], (1, dims[5]), jnp.float32, -bound, bound)
    params["final"] = (wf, bf)
    return params


# ---------------- main ----------------

if __name__ == "__main__":
    # Small config consistent with the module: img_size=16 -> z_dim=i_dim=16*16*3=768
    img_size = 16
    z_dim = i_dim = img_size * img_size * 3   # 768 (multiple of 128: lane-dense I/O)
    h_dim = 32
    batch = 8
    num_batches = 4                           # independent batches -> grid axis

    key = jax.random.PRNGKey(0)
    k_params, k_noise = jax.random.split(key)
    params = init_generator_params(k_params, z_dim, i_dim, h_dim)
    noise = jax.random.normal(k_noise, (num_batches, batch, z_dim), jnp.float32)

    out = jax.block_until_ready(generator_forward(params, noise))
    assert out.shape == (num_batches, batch, i_dim), out.shape
    assert bool(jnp.all(jnp.isfinite(out)))
    assert bool(jnp.all(jnp.abs(out) <= 1.0 + 1e-6))        # tanh range

    # Single-batch (2-D) path agrees with the gridded path.
    out0 = jax.block_until_ready(generator_forward(params, noise[0]))
    assert out0.shape == (batch, i_dim), out0.shape
    assert bool(jnp.allclose(out0, out[0], atol=1e-5)), "grid vs single-batch mismatch"

    print("KERNEL_OK")
</pallas_src>

<mosaic_0001>
module attributes {stable_mosaic.version = 11 : i64} {
  func.func @_generator_kernel(%arg0: i32, %arg1: memref<8x768xf32, #tpu.memory_space<vmem>>, %arg2: memref<768x128xbf16, #tpu.memory_space<vmem>>, %arg3: memref<1x128xf32, #tpu.memory_space<vmem>>, %arg4: memref<1x128xf32, #tpu.memory_space<vmem>>, %arg5: memref<128x128xbf16, #tpu.memory_space<vmem>>, %arg6: memref<1x128xf32, #tpu.memory_space<vmem>>, %arg7: memref<1x128xf32, #tpu.memory_space<vmem>>, %arg8: memref<128x128xbf16, #tpu.memory_space<vmem>>, %arg9: memref<1x128xf32, #tpu.memory_space<vmem>>, %arg10: memref<1x128xf32, #tpu.memory_space<vmem>>, %arg11: memref<128x256xbf16, #tpu.memory_space<vmem>>, %arg12: memref<1x256xf32, #tpu.memory_space<vmem>>, %arg13: memref<1x256xf32, #tpu.memory_space<vmem>>, %arg14: memref<256x768xbf16, #tpu.memory_space<vmem>>, %arg15: memref<1x768xf32, #tpu.memory_space<vmem>>, %arg16: memref<8x768xf32, #tpu.memory_space<vmem>>) attributes {dimension_semantics = [#tpu.dimension_semantics<parallel>], iteration_bounds = array<i64: 4>, scalar_prefetch = 0 : i64, scratch_operands = 0 : i64, tpu.core_type = #tpu.core_type<tc>, window_params = [{transform_indices = @transform_0, window_bounds = array<i64: 8, 768>}, {pipeline_mode = #tpu.pipeline_mode<synchronous>, transform_indices = @transform_1, window_bounds = array<i64: 768, 128>}, {pipeline_mode = #tpu.pipeline_mode<synchronous>, transform_indices = @transform_2, window_bounds = array<i64: 1, 128>}, {pipeline_mode = #tpu.pipeline_mode<synchronous>, transform_indices = @transform_3, window_bounds = array<i64: 1, 128>}, {pipeline_mode = #tpu.pipeline_mode<synchronous>, transform_indices = @transform_4, window_bounds = array<i64: 128, 128>}, {pipeline_mode = #tpu.pipeline_mode<synchronous>, transform_indices = @transform_5, window_bounds = array<i64: 1, 128>}, {pipeline_mode = #tpu.pipeline_mode<synchronous>, transform_indices = @transform_6, window_bounds = array<i64: 1, 128>}, {pipeline_mode = #tpu.pipeline_mode<synchronous>, transform_indices = @transform_7, window_bounds = array<i64: 128, 128>}, {pipeline_mode = #tpu.pipeline_mode<synchronous>, transform_indices = @transform_8, window_bounds = array<i64: 1, 128>}, {pipeline_mode = #tpu.pipeline_mode<synchronous>, transform_indices = @transform_9, window_bounds = array<i64: 1, 128>}, {pipeline_mode = #tpu.pipeline_mode<synchronous>, transform_indices = @transform_10, window_bounds = array<i64: 128, 256>}, {pipeline_mode = #tpu.pipeline_mode<synchronous>, transform_indices = @transform_11, window_bounds = array<i64: 1, 256>}, {pipeline_mode = #tpu.pipeline_mode<synchronous>, transform_indices = @transform_12, window_bounds = array<i64: 1, 256>}, {pipeline_mode = #tpu.pipeline_mode<synchronous>, transform_indices = @transform_13, window_bounds = array<i64: 256, 768>}, {pipeline_mode = #tpu.pipeline_mode<synchronous>, transform_indices = @transform_14, window_bounds = array<i64: 1, 768>}, {transform_indices = @transform_15, window_bounds = array<i64: 8, 768>}]} {
    %c0 = arith.constant 0 : index
    %c0_0 = arith.constant 0 : index
    %0 = vector.load %arg1[%c0, %c0_0] : memref<8x768xf32, #tpu.memory_space<vmem>>, vector<8x768xf32>
    %1 = arith.truncf %0 : vector<8x768xf32> to vector<8x768xbf16>
    %c0_1 = arith.constant 0 : index
    %c0_2 = arith.constant 0 : index
    %2 = vector.load %arg2[%c0_1, %c0_2] : memref<768x128xbf16, #tpu.memory_space<vmem>>, vector<768x128xbf16>
    %cst = arith.constant dense<0.000000e+00> : vector<8x128xf32>
    %3 = tpu.matmul %1, %2, %cst {dimension_numbers = #tpu.dot_dimension_numbers<[1], [0], [0], [1], [0, 0, 1, 1], [], []>} : vector<8x768xbf16>, vector<768x128xbf16>, vector<8x128xf32> -> vector<8x128xf32>
    %cst_3 = arith.constant dense<0.000000e+00> : vector<128xf32>
    %4 = vector.multi_reduction <add>, %3, %cst_3 [0] : vector<8x128xf32> to vector<128xf32>
    %5 = vector.shape_cast %4 : vector<128xf32> to vector<1x128xf32>
    %cst_4 = arith.constant 8.000000e+00 : f32
    %6 = vector.broadcast %cst_4 : f32 to vector<1x128xf32>
    %7 = arith.divf %5, %6 : vector<1x128xf32>
    %8 = arith.mulf %3, %3 : vector<8x128xf32>
    %cst_5 = arith.constant dense<0.000000e+00> : vector<128xf32>
    %9 = vector.multi_reduction <add>, %8, %cst_5 [0] : vector<8x128xf32> to vector<128xf32>
    %10 = vector.shape_cast %9 : vector<128xf32> to vector<1x128xf32>
    %cst_6 = arith.constant 8.000000e+00 : f32
    %11 = vector.broadcast %cst_6 : f32 to vector<1x128xf32>
    %12 = arith.divf %10, %11 : vector<1x128xf32>
    %13 = arith.mulf %7, %7 : vector<1x128xf32>
    %14 = arith.subf %12, %13 : vector<1x128xf32>
    %cst_7 = arith.constant 0.000000e+00 : f32
    %15 = vector.broadcast %cst_7 : f32 to vector<1x128xf32>
    %16 = arith.maximumf %14, %15 : vector<1x128xf32>
    %c0_8 = arith.constant 0 : index
    %c0_9 = arith.constant 0 : index
    %17 = vector.load %arg3[%c0_8, %c0_9] : memref<1x128xf32, #tpu.memory_space<vmem>>, vector<1x128xf32>
    %cst_10 = arith.constant 9.99999974E-6 : f32
    %18 = vector.broadcast %cst_10 : f32 to vector<1x128xf32>
    %19 = arith.addf %16, %18 : vector<1x128xf32>
    %20 = math.rsqrt %19 : vector<1x128xf32>
    %21 = arith.mulf %17, %20 : vector<1x128xf32>
    %c0_11 = arith.constant 0 : index
    %c0_12 = arith.constant 0 : index
    %22 = vector.load %arg4[%c0_11, %c0_12] : memref<1x128xf32, #tpu.memory_space<vmem>>, vector<1x128xf32>
    %23 = arith.mulf %7, %21 : vector<1x128xf32>
    %24 = arith.subf %22, %23 : vector<1x128xf32>
    %25 = vector.broadcast %21 : vector<1x128xf32> to vector<8x128xf32>
    %26 = arith.mulf %3, %25 : vector<8x128xf32>
    %27 = vector.broadcast %24 : vector<1x128xf32> to vector<8x128xf32>
    %28 = arith.addf %26, %27 : vector<8x128xf32>
    %cst_13 = arith.constant 0.000000e+00 : f32
    %29 = vector.broadcast %cst_13 : f32 to vector<8x128xf32>
    %30 = arith.maximumf %28, %29 : vector<8x128xf32>
    %31 = arith.truncf %30 : vector<8x128xf32> to vector<8x128xbf16>
    %c0_14 = arith.constant 0 : index
    %c0_15 = arith.constant 0 : index
    %32 = vector.load %arg5[%c0_14, %c0_15] : memref<128x128xbf16, #tpu.memory_space<vmem>>, vector<128x128xbf16>
    %cst_16 = arith.constant dense<0.000000e+00> : vector<8x128xf32>
    %33 = tpu.matmul %31, %32, %cst_16 {dimension_numbers = #tpu.dot_dimension_numbers<[1], [0], [0], [1], [0, 0, 1, 1], [], []>} : vector<8x128xbf16>, vector<128x128xbf16>, vector<8x128xf32> -> vector<8x128xf32>
    %cst_17 = arith.constant dense<0.000000e+00> : vector<128xf32>
    %34 = vector.multi_reduction <add>, %33, %cst_17 [0] : vector<8x128xf32> to vector<128xf32>
    %35 = vector.shape_cast %34 : vector<128xf32> to vector<1x128xf32>
    %cst_18 = arith.constant 8.000000e+00 : f32
    %36 = vector.broadcast %cst_18 : f32 to vector<1x128xf32>
    %37 = arith.divf %35, %36 : vector<1x128xf32>
    %38 = arith.mulf %33, %33 : vector<8x128xf32>
    %cst_19 = arith.constant dense<0.000000e+00> : vector<128xf32>
    %39 = vector.multi_reduction <add>, %38, %cst_19 [0] : vector<8x128xf32> to vector<128xf32>
    %40 = vector.shape_cast %39 : vector<128xf32> to vector<1x128xf32>
    %cst_20 = arith.constant 8.000000e+00 : f32
    %41 = vector.broadcast %cst_20 : f32 to vector<1x128xf32>
    %42 = arith.divf %40, %41 : vector<1x128xf32>
    %43 = arith.mulf %37, %37 : vector<1x128xf32>
    %44 = arith.subf %42, %43 : vector<1x128xf32>
    %cst_21 = arith.constant 0.000000e+00 : f32
    %45 = vector.broadcast %cst_21 : f32 to vector<1x128xf32>
    %46 = arith.maximumf %44, %45 : vector<1x128xf32>
    %c0_22 = arith.constant 0 : index
    %c0_23 = arith.constant 0 : index
    %47 = vector.load %arg6[%c0_22, %c0_23] : memref<1x128xf32, #tpu.memory_space<vmem>>, vector<1x128xf32>
    %cst_24 = arith.constant 9.99999974E-6 : f32
    %48 = vector.broadcast %cst_24 : f32 to vector<1x128xf32>
    %49 = arith.addf %46, %48 : vector<1x128xf32>
    %50 = math.rsqrt %49 : vector<1x128xf32>
    %51 = arith.mulf %47, %50 : vector<1x128xf32>
    %c0_25 = arith.constant 0 : index
    %c0_26 = arith.constant 0 : index
    %52 = vector.load %arg7[%c0_25, %c0_26] : memref<1x128xf32, #tpu.memory_space<vmem>>, vector<1x128xf32>
    %53 = arith.mulf %37, %51 : vector<1x128xf32>
    %54 = arith.subf %52, %53 : vector<1x128xf32>
    %55 = vector.broadcast %51 : vector<1x128xf32> to vector<8x128xf32>
    %56 = arith.mulf %33, %55 : vector<8x128xf32>
    %57 = vector.broadcast %54 : vector<1x128xf32> to vector<8x128xf32>
    %58 = arith.addf %56, %57 : vector<8x128xf32>
    %cst_27 = arith.constant 0.000000e+00 : f32
    %59 = vector.broadcast %cst_27 : f32 to vector<8x128xf32>
    %60 = arith.maximumf %58, %59 : vector<8x128xf32>
    %61 = arith.truncf %60 : vector<8x128xf32> to vector<8x128xbf16>
    %c0_28 = arith.constant 0 : index
    %c0_29 = arith.constant 0 : index
    %62 = vector.load %arg8[%c0_28, %c0_29] : memref<128x128xbf16, #tpu.memory_space<vmem>>, vector<128x128xbf16>
    %cst_30 = arith.constant dense<0.000000e+00> : vector<8x128xf32>
    %63 = tpu.matmul %61, %62, %cst_30 {dimension_numbers = #tpu.dot_dimension_numbers<[1], [0], [0], [1], [0, 0, 1, 1], [], []>} : vector<8x128xbf16>, vector<128x128xbf16>, vector<8x128xf32> -> vector<8x128xf32>
    %cst_31 = arith.constant dense<0.000000e+00> : vector<128xf32>
    %64 = vector.multi_reduction <add>, %63, %cst_31 [0] : vector<8x128xf32> to vector<128xf32>
    %65 = vector.shape_cast %64 : vector<128xf32> to vector<1x128xf32>
    %cst_32 = arith.constant 8.000000e+00 : f32
    %66 = vector.broadcast %cst_32 : f32 to vector<1x128xf32>
    %67 = arith.divf %65, %66 : vector<1x128xf32>
    %68 = arith.mulf %63, %63 : vector<8x128xf32>
    %cst_33 = arith.constant dense<0.000000e+00> : vector<128xf32>
    %69 = vector.multi_reduction <add>, %68, %cst_33 [0] : vector<8x128xf32> to vector<128xf32>
    %70 = vector.shape_cast %69 : vector<128xf32> to vector<1x128xf32>
    %cst_34 = arith.constant 8.000000e+00 : f32
    %71 = vector.broadcast %cst_34 : f32 to vector<1x128xf32>
    %72 = arith.divf %70, %71 : vector<1x128xf32>
    %73 = arith.mulf %67, %67 : vector<1x128xf32>
    %74 = arith.subf %72, %73 : vector<1x128xf32>
    %cst_35 = arith.constant 0.000000e+00 : f32
    %75 = vector.broadcast %cst_35 : f32 to vector<1x128xf32>
    %76 = arith.maximumf %74, %75 : vector<1x128xf32>
    %c0_36 = arith.constant 0 : index
    %c0_37 = arith.constant 0 : index
    %77 = vector.load %arg9[%c0_36, %c0_37] : memref<1x128xf32, #tpu.memory_space<vmem>>, vector<1x128xf32>
    %cst_38 = arith.constant 9.99999974E-6 : f32
    %78 = vector.broadcast %cst_38 : f32 to vector<1x128xf32>
    %79 = arith.addf %76, %78 : vector<1x128xf32>
    %80 = math.rsqrt %79 : vector<1x128xf32>
    %81 = arith.mulf %77, %80 : vector<1x128xf32>
    %c0_39 = arith.constant 0 : index
    %c0_40 = arith.constant 0 : index
    %82 = vector.load %arg10[%c0_39, %c0_40] : memref<1x128xf32, #tpu.memory_space<vmem>>, vector<1x128xf32>
    %83 = arith.mulf %67, %81 : vector<1x128xf32>
    %84 = arith.subf %82, %83 : vector<1x128xf32>
    %85 = vector.broadcast %81 : vector<1x128xf32> to vector<8x128xf32>
    %86 = arith.mulf %63, %85 : vector<8x128xf32>
    %87 = vector.broadcast %84 : vector<1x128xf32> to vector<8x128xf32>
    %88 = arith.addf %86, %87 : vector<8x128xf32>
    %cst_41 = arith.constant 0.000000e+00 : f32
    %89 = vector.broadcast %cst_41 : f32 to vector<8x128xf32>
    %90 = arith.maximumf %88, %89 : vector<8x128xf32>
    %91 = arith.truncf %90 : vector<8x128xf32> to vector<8x128xbf16>
    %c0_42 = arith.constant 0 : index
    %c0_43 = arith.constant 0 : index
    %92 = vector.load %arg11[%c0_42, %c0_43] : memref<128x256xbf16, #tpu.memory_space<vmem>>, vector<128x256xbf16>
    %cst_44 = arith.constant dense<0.000000e+00> : vector<8x256xf32>
    %93 = tpu.matmul %91, %92, %cst_44 {dimension_numbers = #tpu.dot_dimension_numbers<[1], [0], [0], [1], [0, 0, 1, 1], [], []>} : vector<8x128xbf16>, vector<128x256xbf16>, vector<8x256xf32> -> vector<8x256xf32>
    %cst_45 = arith.constant dense<0.000000e+00> : vector<256xf32>
    %94 = vector.multi_reduction <add>, %93, %cst_45 [0] : vector<8x256xf32> to vector<256xf32>
    %95 = vector.shape_cast %94 : vector<256xf32> to vector<1x256xf32>
    %cst_46 = arith.constant 8.000000e+00 : f32
    %96 = vector.broadcast %cst_46 : f32 to vector<1x256xf32>
    %97 = arith.divf %95, %96 : vector<1x256xf32>
    %98 = arith.mulf %93, %93 : vector<8x256xf32>
    %cst_47 = arith.constant dense<0.000000e+00> : vector<256xf32>
    %99 = vector.multi_reduction <add>, %98, %cst_47 [0] : vector<8x256xf32> to vector<256xf32>
    %100 = vector.shape_cast %99 : vector<256xf32> to vector<1x256xf32>
    %cst_48 = arith.constant 8.000000e+00 : f32
    %101 = vector.broadcast %cst_48 : f32 to vector<1x256xf32>
    %102 = arith.divf %100, %101 : vector<1x256xf32>
    %103 = arith.mulf %97, %97 : vector<1x256xf32>
    %104 = arith.subf %102, %103 : vector<1x256xf32>
    %cst_49 = arith.constant 0.000000e+00 : f32
    %105 = vector.broadcast %cst_49 : f32 to vector<1x256xf32>
    %106 = arith.maximumf %104, %105 : vector<1x256xf32>
    %c0_50 = arith.constant 0 : index
    %c0_51 = arith.constant 0 : index
    %107 = vector.load %arg12[%c0_50, %c0_51] : memref<1x256xf32, #tpu.memory_space<vmem>>, vector<1x256xf32>
    %cst_52 = arith.constant 9.99999974E-6 : f32
    %108 = vector.broadcast %cst_52 : f32 to vector<1x256xf32>
    %109 = arith.addf %106, %108 : vector<1x256xf32>
    %110 = math.rsqrt %109 : vector<1x256xf32>
    %111 = arith.mulf %107, %110 : vector<1x256xf32>
    %c0_53 = arith.constant 0 : index
    %c0_54 = arith.constant 0 : index
    %112 = vector.load %arg13[%c0_53, %c0_54] : memref<1x256xf32, #tpu.memory_space<vmem>>, vector<1x256xf32>
    %113 = arith.mulf %97, %111 : vector<1x256xf32>
    %114 = arith.subf %112, %113 : vector<1x256xf32>
    %115 = vector.broadcast %111 : vector<1x256xf32> to vector<8x256xf32>
    %116 = arith.mulf %93, %115 : vector<8x256xf32>
    %117 = vector.broadcast %114 : vector<1x256xf32> to vector<8x256xf32>
    %118 = arith.addf %116, %117 : vector<8x256xf32>
    %cst_55 = arith.constant 0.000000e+00 : f32
    %119 = vector.broadcast %cst_55 : f32 to vector<8x256xf32>
    %120 = arith.maximumf %118, %119 : vector<8x256xf32>
    %121 = arith.truncf %120 : vector<8x256xf32> to vector<8x256xbf16>
    %c0_56 = arith.constant 0 : index
    %c0_57 = arith.constant 0 : index
    %122 = vector.load %arg14[%c0_56, %c0_57] : memref<256x768xbf16, #tpu.memory_space<vmem>>, vector<256x768xbf16>
    %cst_58 = arith.constant dense<0.000000e+00> : vector<8x768xf32>
    %123 = tpu.matmul %121, %122, %cst_58 {dimension_numbers = #tpu.dot_dimension_numbers<[1], [0], [0], [1], [0, 0, 1, 1], [], []>} : vector<8x256xbf16>, vector<256x768xbf16>, vector<8x768xf32> -> vector<8x768xf32>
    %c0_59 = arith.constant 0 : index
    %c0_60 = arith.constant 0 : index
    %124 = vector.load %arg15[%c0_59, %c0_60] : memref<1x768xf32, #tpu.memory_space<vmem>>, vector<1x768xf32>
    %125 = vector.broadcast %124 : vector<1x768xf32> to vector<8x768xf32>
    %126 = arith.addf %123, %125 : vector<8x768xf32>
    %127 = math.tanh %126 : vector<8x768xf32>
    %c0_61 = arith.constant 0 : index
    %c0_62 = arith.constant 0 : index
    %128 = vector.load %arg16[%c0_61, %c0_62] : memref<8x768xf32, #tpu.memory_space<vmem>>, vector<8x768xf32>
    tpu.vector_store %arg16[%c0_61, %c0_62], %127 {strides = array<i32>} : memref<8x768xf32, #tpu.memory_space<vmem>>, vector<8x768xf32>,
    return
  }
  func.func @transform_0(%arg0: i32) -> (i32, i32) {
    %c0_i32 = arith.constant 0 : i32
    %c0_i32_0 = arith.constant 0 : i32
    return %arg0, %c0_i32 : i32, i32
  }
  func.func @transform_1(%arg0: i32) -> (i32, i32) {
    %c0_i32 = arith.constant 0 : i32
    %c0_i32_0 = arith.constant 0 : i32
    %c0_i32_1 = arith.constant 0 : i32
    return %c0_i32, %c0_i32_0 : i32, i32
  }
  func.func @transform_2(%arg0: i32) -> (i32, i32) {
    %c0_i32 = arith.constant 0 : i32
    %c0_i32_0 = arith.constant 0 : i32
    %c0_i32_1 = arith.constant 0 : i32
    return %c0_i32, %c0_i32_0 : i32, i32
  }
  func.func @transform_3(%arg0: i32) -> (i32, i32) {
    %c0_i32 = arith.constant 0 : i32
    %c0_i32_0 = arith.constant 0 : i32
    %c0_i32_1 = arith.constant 0 : i32
    return %c0_i32, %c0_i32_0 : i32, i32
  }
  func.func @transform_4(%arg0: i32) -> (i32, i32) {
    %c0_i32 = arith.constant 0 : i32
    %c0_i32_0 = arith.constant 0 : i32
    %c0_i32_1 = arith.constant 0 : i32
    return %c0_i32, %c0_i32_0 : i32, i32
  }
  func.func @transform_5(%arg0: i32) -> (i32, i32) {
    %c0_i32 = arith.constant 0 : i32
    %c0_i32_0 = arith.constant 0 : i32
    %c0_i32_1 = arith.constant 0 : i32
    return %c0_i32, %c0_i32_0 : i32, i32
  }
  func.func @transform_6(%arg0: i32) -> (i32, i32) {
    %c0_i32 = arith.constant 0 : i32
    %c0_i32_0 = arith.constant 0 : i32
    %c0_i32_1 = arith.constant 0 : i32
    return %c0_i32, %c0_i32_0 : i32, i32
  }
  func.func @transform_7(%arg0: i32) -> (i32, i32) {
    %c0_i32 = arith.constant 0 : i32
    %c0_i32_0 = arith.constant 0 : i32
    %c0_i32_1 = arith.constant 0 : i32
    return %c0_i32, %c0_i32_0 : i32, i32
  }
  func.func @transform_8(%arg0: i32) -> (i32, i32) {
    %c0_i32 = arith.constant 0 : i32
    %c0_i32_0 = arith.constant 0 : i32
    %c0_i32_1 = arith.constant 0 : i32
    return %c0_i32, %c0_i32_0 : i32, i32
  }
  func.func @transform_9(%arg0: i32) -> (i32, i32) {
    %c0_i32 = arith.constant 0 : i32
    %c0_i32_0 = arith.constant 0 : i32
    %c0_i32_1 = arith.constant 0 : i32
    return %c0_i32, %c0_i32_0 : i32, i32
  }
  func.func @transform_10(%arg0: i32) -> (i32, i32) {
    %c0_i32 = arith.constant 0 : i32
    %c0_i32_0 = arith.constant 0 : i32
    %c0_i32_1 = arith.constant 0 : i32
    return %c0_i32, %c0_i32_0 : i32, i32
  }
  func.func @transform_11(%arg0: i32) -> (i32, i32) {
    %c0_i32 = arith.constant 0 : i32
    %c0_i32_0 = arith.constant 0 : i32
    %c0_i32_1 = arith.constant 0 : i32
    return %c0_i32, %c0_i32_0 : i32, i32
  }
  func.func @transform_12(%arg0: i32) -> (i32, i32) {
    %c0_i32 = arith.constant 0 : i32
    %c0_i32_0 = arith.constant 0 : i32
    %c0_i32_1 = arith.constant 0 : i32
    return %c0_i32, %c0_i32_0 : i32, i32
  }
  func.func @transform_13(%arg0: i32) -> (i32, i32) {
    %c0_i32 = arith.constant 0 : i32
    %c0_i32_0 = arith.constant 0 : i32
    %c0_i32_1 = arith.constant 0 : i32
    return %c0_i32, %c0_i32_0 : i32, i32
  }
  func.func @transform_14(%arg0: i32) -> (i32, i32) {
    %c0_i32 = arith.constant 0 : i32
    %c0_i32_0 = arith.constant 0 : i32
    %c0_i32_1 = arith.constant 0 : i32
    return %c0_i32, %c0_i32_0 : i32, i32
  }
  func.func @transform_15(%arg0: i32) -> (i32, i32) {
    %c0_i32 = arith.constant 0 : i32
    %c0_i32_0 = arith.constant 0 : i32
    return %arg0, %c0_i32 : i32, i32
  }
}

</mosaic_0001>

<llo_original>
// kernel: tpu_custom_call.1
$region0: #{tpu_custom_call.1}
  #allocation0 [shape = 'u32[]', space=smem, size = 0x4, offset = 0x4, fixed_abs, tag = 'smem constant byte address 0x4 - core index']
  #allocation1 [shape = 'u32[144,128]{1,0:T(1,128)}', space=vmem, size = 0x12000, scoped, tag = 'internal scratch']
  %s0 = inlined_call_operand.hbm [shape: f32[32,768], index: 0, kind: input, shape index: {}]
  %s1 = inlined_call_operand.hbm [shape: bf16[768,128], index: 1, kind: input, shape index: {}]
  %s2 = inlined_call_operand.vmem [shape: f32[1,128], index: 2, kind: input, shape index: {}]
  %s3 = inlined_call_operand.hbm [shape: f32[1,128], index: 3, kind: input, shape index: {}]
  %s4 = inlined_call_operand.hbm [shape: bf16[128,128], index: 4, kind: input, shape index: {}]
  %s5 = inlined_call_operand.vmem [shape: f32[1,128], index: 5, kind: input, shape index: {}]
  %s6 = inlined_call_operand.vmem [shape: f32[1,128], index: 6, kind: input, shape index: {}]
  %s7 = inlined_call_operand.hbm [shape: bf16[128,128], index: 7, kind: input, shape index: {}]
  %s8 = inlined_call_operand.vmem [shape: f32[1,128], index: 8, kind: input, shape index: {}]
  %s9 = inlined_call_operand.vmem [shape: f32[1,128], index: 9, kind: input, shape index: {}]
  %s10 = inlined_call_operand.hbm [shape: bf16[128,256], index: 10, kind: input, shape index: {}]
  %s11 = inlined_call_operand.vmem [shape: f32[1,256], index: 11, kind: input, shape index: {}]
  %s12 = inlined_call_operand.vmem [shape: f32[1,256], index: 12, kind: input, shape index: {}]
  %s13 = inlined_call_operand.hbm [shape: bf16[256,768], index: 13, kind: input, shape index: {}]
  %s14 = inlined_call_operand.vmem [shape: f32[1,768], index: 14, kind: input, shape index: {}]
  %s15 = inlined_call_operand.hbm [shape: f32[32,768], index: 15, kind: output, shape index: {}]
  %s16 = sld [smem:[#allocation0]]
  $region121: #{tpu_custom_call.1} parent=0
    _
  %s18 = ssub.s32 1, %s16
  %s19 = scalar_select 0, %s18, %s16
  $region1: #{tpu_custom_call.1} parent=0
    #allocation2 [shape = 'u8[49152]{0}', space=vmem, size = 0xc000, scoped, tag = 'input window, operand 0']
    #allocation3 [shape = 's32[2]{0}', space=sflag, size = 0x8, scoped, tag = 'scoped memory for tpu_custom_call.1']
    #allocation4 [shape = 's32[2]{0}', space=sflag, size = 0x8, scoped, tag = 'scoped memory for tpu_custom_call.1']
    #allocation5 [shape = 'u8[196608]{0}', space=vmem, size = 0x30000, scoped, tag = 'input window, operand 1, single buffered']
    #allocation6 [shape = 's32[1]{0}', space=sflag, size = 0x4, scoped, tag = 'scoped memory for tpu_custom_call.1']
    #allocation7 [shape = 'u8[512]{0}', space=vmem, size = 0x400, scoped, tag = 'input window, operand 3, single buffered']
    #allocation8 [shape = 'u8[32768]{0}', space=vmem, size = 0x8000, scoped, tag = 'input window, operand 4, single buffered']
    #allocation9 [shape = 's32[1]{0}', space=sflag, size = 0x4, scoped, tag = 'scoped memory for tpu_custom_call.1']
    #allocation10 [shape = 'u8[32768]{0}', space=vmem, size = 0x8000, scoped, tag = 'input window, operand 7, single buffered']
    #allocation11 [shape = 'u8[65536]{0}', space=vmem, size = 0x10000, scoped, tag = 'input window, operand 10, single buffered']
    #allocation12 [shape = 's32[1]{0}', space=sflag, size = 0x4, scoped, tag = 'scoped memory for tpu_custom_call.1']
    #allocation13 [shape = 'u8[393216]{0}', space=vmem, size = 0x60000, scoped, tag = 'input window, operand 13, single buffered']
    #allocation14 [shape = 'u8[49152]{0}', space=vmem, size = 0xc000, scoped, tag = 'output window, operand 0']
    %20 = vsyncpa [#allocation3], 0
    %s21 = scalar_lea.sflag [#allocation3], 1
    %22 = vsyncpa %s21, 0
    %23 = vsyncpa [#allocation6], 0
    %24 = vsyncpa [#allocation9], 0
    %25 = vsyncpa [#allocation12], 0
    %26 = vsyncpa [#allocation4], 0
    %s27 = scalar_lea.sflag [#allocation4], 1
    %28 = vsyncpa %s27, 0
    loop: start=0, step=1, limit=6
    $region2: #{tpu_custom_call.1} parent=1 // loop_pre_header
      _
    $region3: #{tpu_custom_call.1} parent=1 // loop_header
      %s30 = sphi 0, %s34
      %p31 = scmp.ge.s32.totalorder %s30, 6
      %s40 = sphi 0, %s42
      %s43 = sphi 0, %s40
      %s44 = sphi 0, %s43
      %s60 = sphi 0, %s44
      %s64 = sphi 0, %s64
      %s66 = sphi 0, %s64
      %s67 = sphi 0, %s66
      %s81 = sphi 0, %s67
      %s85 = sphi 0, %s85
      %s87 = sphi 0, %s85
      %s88 = sphi 0, %s87
      %s102 = sphi 0, %s88
      %s106 = sphi 0, %s106
      %s108 = sphi 0, %s106
      %s109 = sphi 0, %s108
      %s123 = sphi 0, %s109
      %s127 = sphi 0, %s127
      %s129 = sphi 0, %s127
      %s130 = sphi 0, %s129
      %s144 = sphi 0, %s130
      %s148 = sphi 0, %s148
      %s150 = sphi 0, %s148
      %s151 = sphi 0, %s150
      %s165 = sphi 0, %s151
      %s169 = sphi 0, %s169
      %s171 = sphi 0, %s169
      %s172 = sphi 0, %s171
      %s186 = sphi 0, %s172
      %s190 = sphi 0, %s190
      %s192 = sphi 0, %s190
      %s193 = sphi 0, %s192
      %s207 = sphi 0, %s193
      %s211 = sphi 0, %s211
      %s213 = sphi 0, %s211
      %s214 = sphi 0, %s213
      %s228 = sphi 0, %s214
      %s232 = sphi 0, %s232
      %s234 = sphi 0, %s232
      %s235 = sphi 0, %s234
      %s249 = sphi 0, %s235
      %s253 = sphi 0, %s253
      %s255 = sphi 0, %s253
      %s256 = sphi 0, %s255
      %s270 = sphi 0, %s256
      %s274 = sphi 0, %s274
      %s276 = sphi 0, %s274
      %s277 = sphi 0, %s276
      %s291 = sphi 0, %s277
      %s295 = sphi 0, %s295
      %s297 = sphi 0, %s295
      %s298 = sphi 0, %s297
      %s312 = sphi 0, %s298
      %s316 = sphi 0, %s316
      %s318 = sphi 0, %s316
      %s319 = sphi 0, %s318
      %s333 = sphi 0, %s319
      %s337 = sphi 0, %s337
      %s339 = sphi 0, %s337
      %s340 = sphi 0, %s339
      %s354 = sphi 0, %s340
      %s360 = sphi 0, %s362
      %s363 = sphi 0, %s360
      %s364 = sphi 0, %s363
      %s380 = sphi 0, %s364
    $region4: #{tpu_custom_call.1} parent=1 // loop_header_branch
      %33 = sbr.rel (%p31) target = $region8
    $region5: #{tpu_custom_call.1} parent=1 // loop_body
      %s35 = ssub.s32 %s30, 1
      %s36 = ssub.s32 %s30, 2
      %s37 = sadd.s32 %s30, 1
      %s38 = ssub.s32 %s30, %s37
      %p39 = scmp.eq.s32.totalorder %s38, 0
      %s41 = sadd.s32 %s40, 1
      %s42 = scalar_select %p39, %s40, %s41
      %p45 = pneg %p39
      %p46 = scmp.eq.s32.totalorder %s30, 3
      %p47 = por %p45, %p46
      %p48 = scmp.ne.s32.totalorder %s40, %s43
      %p49 = scmp.eq.s32.totalorder %s30, 0
      %p50 = por %p48, %p49
      %p51 = scmp.ne.s32.totalorder %s40, %s43
      %p52 = scmp.eq.s32.totalorder %s35, 3
      %p53 = por %p51, %p52
      %p54 = scmp.ne.s32.totalorder %s43, %s44
      %p55 = scmp.eq.s32.totalorder %s35, 0
      %p56 = por %p54, %p55
      %p57 = scmp.ne.s32.totalorder %s43, %s44
      %p58 = scmp.eq.s32.totalorder %s36, 3
      %p59 = por %p57, %p58
      %p61 = scmp.ne.s32.totalorder %s44, %s60
      %p62 = scmp.eq.s32.totalorder %s36, 0
      %p63 = por %p61, %p62
      %s65 = sadd.s32 %s64, 1
      %p68 = scmp.eq.s32.totalorder %s30, 3
      %p69 = scmp.ne.s32.totalorder %s64, %s66
      %p70 = scmp.eq.s32.totalorder %s30, 0
      %p71 = por %p69, %p70
      %p72 = scmp.ne.s32.totalorder %s64, %s66
      %p73 = scmp.eq.s32.totalorder %s35, 3
      %p74 = por %p72, %p73
      %p75 = scmp.ne.s32.totalorder %s66, %s67
      %p76 = scmp.eq.s32.totalorder %s35, 0
      %p77 = por %p75, %p76
      %p78 = scmp.ne.s32.totalorder %s66, %s67
      %p79 = scmp.eq.s32.totalorder %s36, 3
      %p80 = por %p78, %p79
      %p82 = scmp.ne.s32.totalorder %s67, %s81
      %p83 = scmp.eq.s32.totalorder %s36, 0
      %p84 = por %p82, %p83
      %s86 = sadd.s32 %s85, 1
      %p89 = scmp.eq.s32.totalorder %s30, 3
      %p90 = scmp.ne.s32.totalorder %s85, %s87
      %p91 = scmp.eq.s32.totalorder %s30, 0
      %p92 = por %p90, %p91
      %p93 = scmp.ne.s32.totalorder %s85, %s87
      %p94 = scmp.eq.s32.totalorder %s35, 3
      %p95 = por %p93, %p94
      %p96 = scmp.ne.s32.totalorder %s87, %s88
      %p97 = scmp.eq.s32.totalorder %s35, 0
      %p98 = por %p96, %p97
      %p99 = scmp.ne.s32.totalorder %s87, %s88
      %p100 = scmp.eq.s32.totalorder %s36, 3
      %p101 = por %p99, %p100
      %p103 = scmp.ne.s32.totalorder %s88, %s102
      %p104 = scmp.eq.s32.totalorder %s36, 0
      %p105 = por %p103, %p104
      %s107 = sadd.s32 %s106, 1
      %p110 = scmp.eq.s32.totalorder %s30, 3
      %p111 = scmp.ne.s32.totalorder %s106, %s108
      %p112 = scmp.eq.s32.totalorder %s30, 0
      %p113 = por %p111, %p112
      %p114 = scmp.ne.s32.totalorder %s106, %s108
      %p115 = scmp.eq.s32.totalorder %s35, 3
      %p116 = por %p114, %p115
      %p117 = scmp.ne.s32.totalorder %s108, %s109
      %p118 = scmp.eq.s32.totalorder %s35, 0
      %p119 = por %p117, %p118
      %p120 = scmp.ne.s32.totalorder %s108, %s109
      %p121 = scmp.eq.s32.totalorder %s36, 3
      %p122 = por %p120, %p121
      %p124 = scmp.ne.s32.totalorder %s109, %s123
      %p125 = scmp.eq.s32.totalorder %s36, 0
      %p126 = por %p124, %p125
      %s128 = sadd.s32 %s127, 1
      %p131 = scmp.eq.s32.totalorder %s30, 3
      %p132 = scmp.ne.s32.totalorder %s127, %s129
      %p133 = scmp.eq.s32.totalorder %s30, 0
      %p134 = por %p132, %p133
      %p135 = scmp.ne.s32.totalorder %s127, %s129
      %p136 = scmp.eq.s32.totalorder %s35, 3
      %p137 = por %p135, %p136
      %p138 = scmp.ne.s32.totalorder %s129, %s130
      %p139 = scmp.eq.s32.totalorder %s35, 0
      %p140 = por %p138, %p139
      %p141 = scmp.ne.s32.totalorder %s129, %s130
      %p142 = scmp.eq.s32.totalorder %s36, 3
      %p143 = por %p141, %p142
      %p145 = scmp.ne.s32.totalorder %s130, %s144
      %p146 = scmp.eq.s32.totalorder %s36, 0
      %p147 = por %p145, %p146
      %s149 = sadd.s32 %s148, 1
      %p152 = scmp.eq.s32.totalorder %s30, 3
      %p153 = scmp.ne.s32.totalorder %s148, %s150
      %p154 = scmp.eq.s32.totalorder %s30, 0
      %p155 = por %p153, %p154
      %p156 = scmp.ne.s32.totalorder %s148, %s150
      %p157 = scmp.eq.s32.totalorder %s35, 3
      %p158 = por %p156, %p157
      %p159 = scmp.ne.s32.totalorder %s150, %s151
      %p160 = scmp.eq.s32.totalorder %s35, 0
      %p161 = por %p159, %p160
      %p162 = scmp.ne.s32.totalorder %s150, %s151
      %p163 = scmp.eq.s32.totalorder %s36, 3
      %p164 = por %p162, %p163
      %p166 = scmp.ne.s32.totalorder %s151, %s165
      %p167 = scmp.eq.s32.totalorder %s36, 0
      %p168 = por %p166, %p167
      %s170 = sadd.s32 %s169, 1
      %p173 = scmp.eq.s32.totalorder %s30, 3
      %p174 = scmp.ne.s32.totalorder %s169, %s171
      %p175 = scmp.eq.s32.totalorder %s30, 0
      %p176 = por %p174, %p175
      %p177 = scmp.ne.s32.totalorder %s169, %s171
      %p178 = scmp.eq.s32.totalorder %s35, 3
      %p179 = por %p177, %p178
      %p180 = scmp.ne.s32.totalorder %s171, %s172
      %p181 = scmp.eq.s32.totalorder %s35, 0
      %p182 = por %p180, %p181
      %p183 = scmp.ne.s32.totalorder %s171, %s172
      %p184 = scmp.eq.s32.totalorder %s36, 3
      %p185 = por %p183, %p184
      %p187 = scmp.ne.s32.totalorder %s172, %s186
      %p188 = scmp.eq.s32.totalorder %s36, 0
      %p189 = por %p187, %p188
      %s191 = sadd.s32 %s190, 1
      %p194 = scmp.eq.s32.totalorder %s30, 3
      %p195 = scmp.ne.s32.totalorder %s190, %s192
      %p196 = scmp.eq.s32.totalorder %s30, 0
      %p197 = por %p195, %p196
      %p198 = scmp.ne.s32.totalorder %s190, %s192
      %p199 = scmp.eq.s32.totalorder %s35, 3
      %p200 = por %p198, %p199
      %p201 = scmp.ne.s32.totalorder %s192, %s193
      %p202 = scmp.eq.s32.totalorder %s35, 0
      %p203 = por %p201, %p202
      %p204 = scmp.ne.s32.totalorder %s192, %s193
      %p205 = scmp.eq.s32.totalorder %s36, 3
      %p206 = por %p204, %p205
      %p208 = scmp.ne.s32.totalorder %s193, %s207
      %p209 = scmp.eq.s32.totalorder %s36, 0
      %p210 = por %p208, %p209
      %s212 = sadd.s32 %s211, 1
      %p215 = scmp.eq.s32.totalorder %s30, 3
      %p216 = scmp.ne.s32.totalorder %s211, %s213
      %p217 = scmp.eq.s32.totalorder %s30, 0
      %p218 = por %p216, %p217
      %p219 = scmp.ne.s32.totalorder %s211, %s213
      %p220 = scmp.eq.s32.totalorder %s35, 3
      %p221 = por %p219, %p220
      %p222 = scmp.ne.s32.totalorder %s213, %s214
      %p223 = scmp.eq.s32.totalorder %s35, 0
      %p224 = por %p222, %p223
      %p225 = scmp.ne.s32.totalorder %s213, %s214
      %p226 = scmp.eq.s32.totalorder %s36, 3
      %p227 = por %p225, %p226
      %p229 = scmp.ne.s32.totalorder %s214, %s228
      %p230 = scmp.eq.s32.totalorder %s36, 0
      %p231 = por %p229, %p230
      %s233 = sadd.s32 %s232, 1
      %p236 = scmp.eq.s32.totalorder %s30, 3
      %p237 = scmp.ne.s32.totalorder %s232, %s234
      %p238 = scmp.eq.s32.totalorder %s30, 0
      %p239 = por %p237, %p238
      %p240 = scmp.ne.s32.totalorder %s232, %s234
      %p241 = scmp.eq.s32.totalorder %s35, 3
      %p242 = por %p240, %p241
      %p243 = scmp.ne.s32.totalorder %s234, %s235
      %p244 = scmp.eq.s32.totalorder %s35, 0
      %p245 = por %p243, %p244
      %p246 = scmp.ne.s32.totalorder %s234, %s235
      %p247 = scmp.eq.s32.totalorder %s36, 3
      %p248 = por %p246, %p247
      %p250 = scmp.ne.s32.totalorder %s235, %s249
      %p251 = scmp.eq.s32.totalorder %s36, 0
      %p252 = por %p250, %p251
      %s254 = sadd.s32 %s253, 1
      %p257 = scmp.eq.s32.totalorder %s30, 3
      %p258 = scmp.ne.s32.totalorder %s253, %s255
      %p259 = scmp.eq.s32.totalorder %s30, 0
      %p260 = por %p258, %p259
      %p261 = scmp.ne.s32.totalorder %s253, %s255
      %p262 = scmp.eq.s32.totalorder %s35, 3
      %p263 = por %p261, %p262
      %p264 = scmp.ne.s32.totalorder %s255, %s256
      %p265 = scmp.eq.s32.totalorder %s35, 0
      %p266 = por %p264, %p265
      %p267 = scmp.ne.s32.totalorder %s255, %s256
      %p268 = scmp.eq.s32.totalorder %s36, 3
      %p269 = por %p267, %p268
      %p271 = scmp.ne.s32.totalorder %s256, %s270
      %p272 = scmp.eq.s32.totalorder %s36, 0
      %p273 = por %p271, %p272
      %s275 = sadd.s32 %s274, 1
      %p278 = scmp.eq.s32.totalorder %s30, 3
      %p279 = scmp.ne.s32.totalorder %s274, %s276
      %p280 = scmp.eq.s32.totalorder %s30, 0
      %p281 = por %p279, %p280
      %p282 = scmp.ne.s32.totalorder %s274, %s276
      %p283 = scmp.eq.s32.totalorder %s35, 3
      %p284 = por %p282, %p283
      %p285 = scmp.ne.s32.totalorder %s276, %s277
      %p286 = scmp.eq.s32.totalorder %s35, 0
      %p287 = por %p285, %p286
      %p288 = scmp.ne.s32.totalorder %s276, %s277
      %p289 = scmp.eq.s32.totalorder %s36, 3
      %p290 = por %p288, %p289
      %p292 = scmp.ne.s32.totalorder %s277, %s291
      %p293 = scmp.eq.s32.totalorder %s36, 0
      %p294 = por %p292, %p293
      %s296 = sadd.s32 %s295, 1
      %p299 = scmp.eq.s32.totalorder %s30, 3
      %p300 = scmp.ne.s32.totalorder %s295, %s297
      %p301 = scmp.eq.s32.totalorder %s30, 0
      %p302 = por %p300, %p301
      %p303 = scmp.ne.s32.totalorder %s295, %s297
      %p304 = scmp.eq.s32.totalorder %s35, 3
      %p305 = por %p303, %p304
      %p306 = scmp.ne.s32.totalorder %s297, %s298
      %p307 = scmp.eq.s32.totalorder %s35, 0
      %p308 = por %p306, %p307
      %p309 = scmp.ne.s32.totalorder %s297, %s298
      %p310 = scmp.eq.s32.totalorder %s36, 3
      %p311 = por %p309, %p310
      %p313 = scmp.ne.s32.totalorder %s298, %s312
      %p314 = scmp.eq.s32.totalorder %s36, 0
      %p315 = por %p313, %p314
      %s317 = sadd.s32 %s316, 1
      %p320 = scmp.eq.s32.totalorder %s30, 3
      %p321 = scmp.ne.s32.totalorder %s316, %s318
      %p322 = scmp.eq.s32.totalorder %s30, 0
      %p323 = por %p321, %p322
      %p324 = scmp.ne.s32.totalorder %s316, %s318
      %p325 = scmp.eq.s32.totalorder %s35, 3
      %p326 = por %p324, %p325
      %p327 = scmp.ne.s32.totalorder %s318, %s319
      %p328 = scmp.eq.s32.totalorder %s35, 0
      %p329 = por %p327, %p328
      %p330 = scmp.ne.s32.totalorder %s318, %s319
      %p331 = scmp.eq.s32.totalorder %s36, 3
      %p332 = por %p330, %p331
      %p334 = scmp.ne.s32.totalorder %s319, %s333
      %p335 = scmp.eq.s32.totalorder %s36, 0
      %p336 = por %p334, %p335
      %s338 = sadd.s32 %s337, 1
      %p341 = scmp.eq.s32.totalorder %s30, 3
      %p342 = scmp.ne.s32.totalorder %s337, %s339
      %p343 = scmp.eq.s32.totalorder %s30, 0
      %p344 = por %p342, %p343
      %p345 = scmp.ne.s32.totalorder %s337, %s339
      %p346 = scmp.eq.s32.totalorder %s35, 3
      %p347 = por %p345, %p346
      %p348 = scmp.ne.s32.totalorder %s339, %s340
      %p349 = scmp.eq.s32.totalorder %s35, 0
      %p350 = por %p348, %p349
      %p351 = scmp.ne.s32.totalorder %s339, %s340
      %p352 = scmp.eq.s32.totalorder %s36, 3
      %p353 = por %p351, %p352
      %p355 = scmp.ne.s32.totalorder %s340, %s354
      %p356 = scmp.eq.s32.totalorder %s36, 0
      %p357 = por %p355, %p356
      %s358 = ssub.s32 %s30, %s37
      %p359 = scmp.eq.s32.totalorder %s358, 0
      %s361 = sadd.s32 %s360, 1
      %s362 = scalar_select %p359, %s360, %s361
      %p365 = pneg %p359
      %p366 = scmp.eq.s32.totalorder %s30, 3
      %p367 = por %p365, %p366
      %p368 = scmp.ne.s32.totalorder %s360, %s363
      %p369 = scmp.eq.s32.totalorder %s30, 0
      %p370 = por %p368, %p369
      %p371 = scmp.ne.s32.totalorder %s360, %s363
      %p372 = scmp.eq.s32.totalorder %s35, 3
      %p373 = por %p371, %p372
      %p374 = scmp.ne.s32.totalorder %s363, %s364
      %p375 = scmp.eq.s32.totalorder %s35, 0
      %p376 = por %p374, %p375
      %p377 = scmp.ne.s32.totalorder %s363, %s364
      %p378 = scmp.eq.s32.totalorder %s36, 3
      %p379 = por %p377, %p378
      %p381 = scmp.ne.s32.totalorder %s364, %s380
      %p382 = scmp.eq.s32.totalorder %s36, 0
      %p383 = por %p381, %p382
      %p384 = scmp.le.s32.totalorder 1, %s30
      %p385 = scmp.lt.s32.totalorder %s30, 5
      %p386 = pnand %p384, %p385
      %p387 = pneg %p386
      // Predicated region
      $region9: #{tpu_custom_call.1} parent=5 // pred_check
        _
      $region10: #{tpu_custom_call.1} parent=5 // pred_check_branch
        %389 = sbr.rel (%p386) target = $region12
      $region11: #{tpu_custom_call.1} parent=5 // pred_region
        %s390 = ssub.s32 %s30, 1
        // Predicated region
        $region13: #{tpu_custom_call.1} parent=11 // pred_check
          %p391 = pneg %p77
        $region14: #{tpu_custom_call.1} parent=11 // pred_check_branch
          %393 = sbr.rel (%p391) target = $region16
        $region15: #{tpu_custom_call.1} parent=11 // pred_region
          %s395 = ssub.s32 6144, 6144
          %396 = vsyncadd [#allocation6], %s395
          %s397 = sshll.u32 [#allocation5], 4
          %s398 = int_to_ptr.vmem [resolvable:$true] %s397
          %403 = dma.hbm_to_vmem [thread:$0]  %s1, 6144, %s398, [#allocation6], 64, 64, 4
        $region16: #{tpu_custom_call.1} parent=11 // pred_fallthru
          _
        // Predicated region
        $region17: #{tpu_custom_call.1} parent=11 // pred_check
          %p404 = pneg %p98
        $region18: #{tpu_custom_call.1} parent=11 // pred_check_branch
          %406 = sbr.rel (%p404) target = $region20
        $region19: #{tpu_custom_call.1} parent=11 // pred_region
          _
        $region20: #{tpu_custom_call.1} parent=11 // pred_fallthru
          _
        // Predicated region
        $region21: #{tpu_custom_call.1} parent=11 // pred_check
          %p407 = pneg %p119
        $region22: #{tpu_custom_call.1} parent=11 // pred_check_branch
          %409 = sbr.rel (%p407) target = $region24
        $region23: #{tpu_custom_call.1} parent=11 // pred_region
          %s411 = ssub.s32 16, 16
          %412 = vsyncadd [#allocation6], %s411
          %s414 = sshll.u32 [#allocation7], 4
          %s415 = int_to_ptr.vmem [resolvable:$true] %s414
          %417 = dma.hbm_to_vmem [thread:$0]  %s3, 16, %s415, [#allocation6]
        $region24: #{tpu_custom_call.1} parent=11 // pred_fallthru
          _
        // Predicated region
        $region25: #{tpu_custom_call.1} parent=11 // pred_check
          %p418 = pneg %p140
        $region26: #{tpu_custom_call.1} parent=11 // pred_check_branch
          %420 = sbr.rel (%p418) target = $region28
        $region27: #{tpu_custom_call.1} parent=11 // pred_region
          %s422 = ssub.s32 1024, 1024
          %423 = vsyncadd [#allocation9], %s422
          %s424 = sshll.u32 [#allocation8], 4
          %s425 = int_to_ptr.vmem [resolvable:$true] %s424
          %430 = dma.hbm_to_vmem [thread:$0]  %s4, 1024, %s425, [#allocation9], 64, 64, 4
        $region28: #{tpu_custom_call.1} parent=11 // pred_fallthru
          _
        // Predicated region
        $region29: #{tpu_custom_call.1} parent=11 // pred_check
          %p431 = pneg %p161
        $region30: #{tpu_custom_call.1} parent=11 // pred_check_branch
          %433 = sbr.rel (%p431) target = $region32
        $region31: #{tpu_custom_call.1} parent=11 // pred_region
          _
        $region32: #{tpu_custom_call.1} parent=11 // pred_fallthru
          _
        // Predicated region
        $region33: #{tpu_custom_call.1} parent=11 // pred_check
          %p434 = pneg %p182
        $region34: #{tpu_custom_call.1} parent=11 // pred_check_branch
          %436 = sbr.rel (%p434) target = $region36
        $region35: #{tpu_custom_call.1} parent=11 // pred_region
          _
        $region36: #{tpu_custom_call.1} parent=11 // pred_fallthru
          _
        // Predicated region
        $region37: #{tpu_custom_call.1} parent=11 // pred_check
          %p437 = pneg %p203
        $region38: #{tpu_custom_call.1} parent=11 // pred_check_branch
          %439 = sbr.rel (%p437) target = $region40
        $region39: #{tpu_custom_call.1} parent=11 // pred_region
          %s441 = ssub.s32 1024, 1024
          %442 = vsyncadd [#allocation9], %s441
          %s443 = sshll.u32 [#allocation10], 4
          %s444 = int_to_ptr.vmem [resolvable:$true] %s443
          %449 = dma.hbm_to_vmem [thread:$0]  %s7, 1024, %s444, [#allocation9], 64, 64, 4
        $region40: #{tpu_custom_call.1} parent=11 // pred_fallthru
          _
        // Predicated region
        $region41: #{tpu_custom_call.1} parent=11 // pred_check
          %p450 = pneg %p224
        $region42: #{tpu_custom_call.1} parent=11 // pred_check_branch
          %452 = sbr.rel (%p450) target = $region44
        $region43: #{tpu_custom_call.1} parent=11 // pred_region
          _
        $region44: #{tpu_custom_call.1} parent=11 // pred_fallthru
          _
        // Predicated region
        $region45: #{tpu_custom_call.1} parent=11 // pred_check
          %p453 = pneg %p245
        $region46: #{tpu_custom_call.1} parent=11 // pred_check_branch
          %455 = sbr.rel (%p453) target = $region48
        $region47: #{tpu_custom_call.1} parent=11 // pred_region
          _
        $region48: #{tpu_custom_call.1} parent=11 // pred_fallthru
          _
        // Predicated region
        $region49: #{tpu_custom_call.1} parent=11 // pred_check
          %p456 = pneg %p266
        $region50: #{tpu_custom_call.1} parent=11 // pred_check_branch
          %458 = sbr.rel (%p456) target = $region52
        $region51: #{tpu_custom_call.1} parent=11 // pred_region
          %s460 = ssub.s32 2048, 2048
          %461 = vsyncadd [#allocation12], %s460
          %s462 = sshll.u32 [#allocation11], 4
          %s463 = int_to_ptr.vmem [resolvable:$true] %s462
          %468 = dma.hbm_to_vmem [thread:$0]  %s10, 2048, %s463, [#allocation12], 128, 128, 8
        $region52: #{tpu_custom_call.1} parent=11 // pred_fallthru
          _
        // Predicated region
        $region53: #{tpu_custom_call.1} parent=11 // pred_check
          %p469 = pneg %p287
        $region54: #{tpu_custom_call.1} parent=11 // pred_check_branch
          %471 = sbr.rel (%p469) target = $region56
        $region55: #{tpu_custom_call.1} parent=11 // pred_region
          _
        $region56: #{tpu_custom_call.1} parent=11 // pred_fallthru
          _
        // Predicated region
        $region57: #{tpu_custom_call.1} parent=11 // pred_check
          %p472 = pneg %p308
        $region58: #{tpu_custom_call.1} parent=11 // pred_check_branch
          %474 = sbr.rel (%p472) target = $region60
        $region59: #{tpu_custom_call.1} parent=11 // pred_region
          _
        $region60: #{tpu_custom_call.1} parent=11 // pred_fallthru
          _
        // Predicated region
        $region61: #{tpu_custom_call.1} parent=11 // pred_check
          %p475 = pneg %p329
        $region62: #{tpu_custom_call.1} parent=11 // pred_check_branch
          %477 = sbr.rel (%p475) target = $region64
        $region63: #{tpu_custom_call.1} parent=11 // pred_region
          %s479 = ssub.s32 12288, 12288
          %480 = vsyncadd [#allocation12], %s479
          %s481 = sshll.u32 [#allocation13], 4
          %s482 = int_to_ptr.vmem [resolvable:$true] %s481
          %487 = dma.hbm_to_vmem [thread:$0]  %s13, 12288, %s482, [#allocation12], 384, 384, 24
        $region64: #{tpu_custom_call.1} parent=11 // pred_fallthru
          _
        // Predicated region
        $region65: #{tpu_custom_call.1} parent=11 // pred_check
          %p488 = pneg %p350
        $region66: #{tpu_custom_call.1} parent=11 // pred_check_branch
          %490 = sbr.rel (%p488) target = $region68
        $region67: #{tpu_custom_call.1} parent=11 // pred_region
          _
        $region68: #{tpu_custom_call.1} parent=11 // pred_fallthru
          _
      $region12: #{tpu_custom_call.1} parent=5 // pred_fallthru
        _
      %p491 = scmp.lt.s32.totalorder %s30, 4
      // Predicated region
      $region69: #{tpu_custom_call.1} parent=5 // pred_check
        %p492 = pneg %p491
      $region70: #{tpu_custom_call.1} parent=5 // pred_check_branch
        %494 = sbr.rel (%p492) target = $region72
      $region71: #{tpu_custom_call.1} parent=5 // pred_region
        // Predicated region
        $region73: #{tpu_custom_call.1} parent=71 // pred_check
          %p495 = pneg %p50
        $region74: #{tpu_custom_call.1} parent=71 // pred_check_branch
          %497 = sbr.rel (%p495) target = $region76
        $region75: #{tpu_custom_call.1} parent=71 // pred_region
          %s498 = sand.u32 %s40, 1
          %s499 = scalar_lea.sflag [#allocation3], %s498
          %s500 = sand.u32 %s40, 1
          %s501 = smul.addr %s500, 48
          %s502 = scalar_lea.vmem [#allocation2], %s501
          %s504 = ssub.s32 768, 768
          %505 = vsyncadd %s499, %s504
          %s506 = smul.addr %s30, 6
          %s507 = smul.addr %s506, 128
          %s508 = scalar_lea.hbm %s0, %s507
          %s510 = sshll.u32 %s502, 4
          %s511 = int_to_ptr.vmem [resolvable:$true] %s510
          %513 = dma.hbm_to_vmem [thread:$0]  %s508, 768, %s511, %s499
        $region76: #{tpu_custom_call.1} parent=71 // pred_fallthru
          _
      $region72: #{tpu_custom_call.1} parent=5 // pred_fallthru
        _
      %p514 = scmp.le.s32.totalorder 1, %s30
      %p515 = scmp.lt.s32.totalorder %s30, 5
      %p516 = pnand %p514, %p515
      %p517 = pneg %p516
      // Predicated region
      $region77: #{tpu_custom_call.1} parent=5 // pred_check
        _
      $region78: #{tpu_custom_call.1} parent=5 // pred_check_branch
        %519 = sbr.rel (%p516) target = $region80
      $region79: #{tpu_custom_call.1} parent=5 // pred_region
        %s520 = ssub.s32 %s30, 1
        %s521 = sand.u32 %s43, 1
        %s522 = scalar_lea.sflag [#allocation3], %s521
        %s523 = sand.u32 %s43, 1
        %s524 = smul.addr %s523, 48
        %s525 = scalar_lea.vmem [#allocation2], %s524
        // Predicated region
        $region81: #{tpu_custom_call.1} parent=79 // pred_check
          %p526 = pneg %p56
        $region82: #{tpu_custom_call.1} parent=79 // pred_check_branch
          %528 = sbr.rel (%p526) target = $region84
        $region83: #{tpu_custom_call.1} parent=79 // pred_region
          %529 = dma.done %s522, 768
        $region84: #{tpu_custom_call.1} parent=79 // pred_fallthru
          _
        // Predicated region
        $region85: #{tpu_custom_call.1} parent=79 // pred_check
          %p530 = pneg %p77
        $region86: #{tpu_custom_call.1} parent=79 // pred_check_branch
          %532 = sbr.rel (%p530) target = $region88
        $region87: #{tpu_custom_call.1} parent=79 // pred_region
          %533 = dma.done [#allocation6], 6144
        $region88: #{tpu_custom_call.1} parent=79 // pred_fallthru
          _
        // Predicated region
        $region89: #{tpu_custom_call.1} parent=79 // pred_check
          %p534 = pneg %p119
        $region90: #{tpu_custom_call.1} parent=79 // pred_check_branch
          %536 = sbr.rel (%p534) target = $region92
        $region91: #{tpu_custom_call.1} parent=79 // pred_region
          %537 = dma.done [#allocation6], 16
        $region92: #{tpu_custom_call.1} parent=79 // pred_fallthru
          _
        // Predicated region
        $region93: #{tpu_custom_call.1} parent=79 // pred_check
          %p538 = pneg %p140
        $region94: #{tpu_custom_call.1} parent=79 // pred_check_branch
          %540 = sbr.rel (%p538) target = $region96
        $region95: #{tpu_custom_call.1} parent=79 // pred_region
          %541 = dma.done [#allocation9], 1024
        $region96: #{tpu_custom_call.1} parent=79 // pred_fallthru
          _
        // Predicated region
        $region97: #{tpu_custom_call.1} parent=79 // pred_check
          %p542 = pneg %p203
        $region98: #{tpu_custom_call.1} parent=79 // pred_check_branch
          %544 = sbr.rel (%p542) target = $region100
        $region99: #{tpu_custom_call.1} parent=79 // pred_region
          %545 = dma.done [#allocation9], 1024
        $region100: #{tpu_custom_call.1} parent=79 // pred_fallthru
          _
        // Predicated region
        $region101: #{tpu_custom_call.1} parent=79 // pred_check
          %p546 = pneg %p266
        $region102: #{tpu_custom_call.1} parent=79 // pred_check_branch
          %548 = sbr.rel (%p546) target = $region104
        $region103: #{tpu_custom_call.1} parent=79 // pred_region
          %549 = dma.done [#allocation12], 2048
        $region104: #{tpu_custom_call.1} parent=79 // pred_fallthru
          _
        // Predicated region
        $region105: #{tpu_custom_call.1} parent=79 // pred_check
          %p550 = pneg %p329
        $region106: #{tpu_custom_call.1} parent=79 // pred_check_branch
          %552 = sbr.rel (%p550) target = $region108
        $region107: #{tpu_custom_call.1} parent=79 // pred_region
          %553 = dma.done [#allocation12], 12288
        $region108: #{tpu_custom_call.1} parent=79 // pred_fallthru
          _
        %s554 = sand.u32 %s43, 1
        %s555 = scalar_lea.sflag [#allocation3], %s554
        %s556 = sand.u32 %s43, 1
        %s557 = smul.addr %s556, 48
        %s558 = scalar_lea.vmem [#allocation2], %s557
        %p559 = pneg %p56
        %p560 = pneg %p53
        %p561 = pneg %p77
        %p562 = pneg %p74
        %p563 = pneg %p98
        %p564 = pneg %p95
        %p565 = pneg %p119
        %p566 = pneg %p116
        %p567 = pneg %p140
        %p568 = pneg %p137
        %p569 = pneg %p161
        %p570 = pneg %p158
        %p571 = pneg %p182
        %p572 = pneg %p179
        %p573 = pneg %p203
        %p574 = pneg %p200
        %p575 = pneg %p224
        %p576 = pneg %p221
        %p577 = pneg %p245
        %p578 = pneg %p242
        %p579 = pneg %p266
        %p580 = pneg %p263
        %p581 = pneg %p287
        %p582 = pneg %p284
        %p583 = pneg %p308
        %p584 = pneg %p305
        %p585 = pneg %p329
        %p586 = pneg %p326
        %p587 = pneg %p350
        %p588 = pneg %p347
        %p589 = pneg %p376
        %p590 = pneg %p373
        %s591 = sand.u32 %s363, 1
        %s592 = scalar_lea.sflag [#allocation4], %s591
        %s593 = sand.u32 %s363, 1
        %s594 = smul.addr %s593, 48
        %s595 = scalar_lea.vmem [#allocation14], %s594
        %v597 = vld [vmem:[%s525] sm:$0xff]
        %v598 = vld [vmem:[%s525 + $0x8] sm:$0xff]
        %v599 = vld [vmem:[%s525 + $0x10] sm:$0xff]
        %v600 = vld [vmem:[%s525 + $0x18] sm:$0xff]
        %v601 = vld [vmem:[%s525 + $0x20] sm:$0xff]
        %v602 = vld [vmem:[%s525 + $0x28] sm:$0xff]
        %v603 = vpack.c.bf16 %v597, %v597
        %v604 = vpack.c.bf16 %v598, %v598
        %v605 = vpack.c.bf16 %v599, %v599
        %v606 = vpack.c.bf16 %v600, %v600
        %v607 = vpack.c.bf16 %v601, %v601
        %v608 = vpack.c.bf16 %v602, %v602
        %v609 = vld [vmem:[#allocation5] sm:$0xf]
        %v610 = vld [vmem:[#allocation5 + $0x4] sm:$0xf]
        %v611 = vld [vmem:[#allocation5 + $0x8] sm:$0xf]
        %v612 = vld [vmem:[#allocation5 + $0xc] sm:$0xf]
        %v613 = vld [vmem:[#allocation5 + $0x10] sm:$0xf]
        %v614 = vld [vmem:[#allocation5 + $0x14] sm:$0xf]
        %v615 = vld [vmem:[#allocation5 + $0x18] sm:$0xf]
        %v616 = vld [vmem:[#allocation5 + $0x1c] sm:$0xf]
        %v617 = vld [vmem:[#allocation5 + $0x20] sm:$0xf]
        %v618 = vld [vmem:[#allocation5 + $0x24] sm:$0xf]
        %v619 = vld [vmem:[#allocation5 + $0x28] sm:$0xf]
        %v620 = vld [vmem:[#allocation5 + $0x2c] sm:$0xf]
        %v621 = vld [vmem:[#allocation5 + $0x30] sm:$0xf]
        %v622 = vld [vmem:[#allocation5 + $0x34] sm:$0xf]
        %v623 = vld [vmem:[#allocation5 + $0x38] sm:$0xf]
        %v624 = vld [vmem:[#allocation5 + $0x3c] sm:$0xf]
        %v625 = vld [vmem:[#allocation5 + $0x40] sm:$0xf]
        %v626 = vld [vmem:[#allocation5 + $0x44] sm:$0xf]
        %v627 = vld [vmem:[#allocation5 + $0x48] sm:$0xf]
        %v628 = vld [vmem:[#allocation5 + $0x4c] sm:$0xf]
        %v629 = vld [vmem:[#allocation5 + $0x50] sm:$0xf]
        %v630 = vld [vmem:[#allocation5 + $0x54] sm:$0xf]
        %v631 = vld [vmem:[#allocation5 + $0x58] sm:$0xf]
        %v632 = vld [vmem:[#allocation5 + $0x5c] sm:$0xf]
        %v633 = vld [vmem:[#allocation5 + $0x60] sm:$0xf]
        %v634 = vld [vmem:[#allocation5 + $0x64] sm:$0xf]
        %v635 = vld [vmem:[#allocation5 + $0x68] sm:$0xf]
        %v636 = vld [vmem:[#allocation5 + $0x6c] sm:$0xf]
        %v637 = vld [vmem:[#allocation5 + $0x70] sm:$0xf]
        %v638 = vld [vmem:[#allocation5 + $0x74] sm:$0xf]
        %v639 = vld [vmem:[#allocation5 + $0x78] sm:$0xf]
        %v640 = vld [vmem:[#allocation5 + $0x7c] sm:$0xf]
        %v641 = vld [vmem:[#allocation5 + $0x80] sm:$0xf]
        %v642 = vld [vmem:[#allocation5 + $0x84] sm:$0xf]
        %v643 = vld [vmem:[#allocation5 + $0x88] sm:$0xf]
        %v644 = vld [vmem:[#allocation5 + $0x8c] sm:$0xf]
        %v645 = vld [vmem:[#allocation5 + $0x90] sm:$0xf]
        %v646 = vld [vmem:[#allocation5 + $0x94] sm:$0xf]
        %v647 = vld [vmem:[#allocation5 + $0x98] sm:$0xf]
        %v648 = vld [vmem:[#allocation5 + $0x9c] sm:$0xf]
        %v649 = vld [vmem:[#allocation5 + $0xa0] sm:$0xf]
        %v650 = vld [vmem:[#allocation5 + $0xa4] sm:$0xf]
        %v651 = vld [vmem:[#allocation5 + $0xa8] sm:$0xf]
        %v652 = vld [vmem:[#allocation5 + $0xac] sm:$0xf]
        %v653 = vld [vmem:[#allocation5 + $0xb0] sm:$0xf]
        %v654 = vld [vmem:[#allocation5 + $0xb4] sm:$0xf]
        %v655 = vld [vmem:[#allocation5 + $0xb8] sm:$0xf]
        %v656 = vld [vmem:[#allocation5 + $0xbc] sm:$0xf]
        %v657 = vld [vmem:[#allocation5 + $0xc0] sm:$0xf]
        %v658 = vld [vmem:[#allocation5 + $0xc4] sm:$0xf]
        %v659 = vld [vmem:[#allocation5 + $0xc8] sm:$0xf]
        %v660 = vld [vmem:[#allocation5 + $0xcc] sm:$0xf]
        %v661 = vld [vmem:[#allocation5 + $0xd0] sm:$0xf]
        %v662 = vld [vmem:[#allocation5 + $0xd4] sm:$0xf]
        %v663 = vld [vmem:[#allocation5 + $0xd8] sm:$0xf]
        %v664 = vld [vmem:[#allocation5 + $0xdc] sm:$0xf]
        %v665 = vld [vmem:[#allocation5 + $0xe0] sm:$0xf]
        %v666 = vld [vmem:[#allocation5 + $0xe4] sm:$0xf]
        %v667 = vld [vmem:[#allocation5 + $0xe8] sm:$0xf]
        %v668 = vld [vmem:[#allocation5 + $0xec] sm:$0xf]
        %v669 = vld [vmem:[#allocation5 + $0xf0] sm:$0xf]
        %v670 = vld [vmem:[#allocation5 + $0xf4] sm:$0xf]
        %v671 = vld [vmem:[#allocation5 + $0xf8] sm:$0xf]
        %v672 = vld [vmem:[#allocation5 + $0xfc] sm:$0xf]
        %v673 = vld [vmem:[#allocation5 + $0x100] sm:$0xf]
        %v674 = vld [vmem:[#allocation5 + $0x104] sm:$0xf]
        %v675 = vld [vmem:[#allocation5 + $0x108] sm:$0xf]
        %v676 = vld [vmem:[#allocation5 + $0x10c] sm:$0xf]
        %v677 = vld [vmem:[#allocation5 + $0x110] sm:$0xf]
        %v678 = vld [vmem:[#allocation5 + $0x114] sm:$0xf]
        %v679 = vld [vmem:[#allocation5 + $0x118] sm:$0xf]
        %v680 = vld [vmem:[#allocation5 + $0x11c] sm:$0xf]
        %v681 = vld [vmem:[#allocation5 + $0x120] sm:$0xf]
        %v682 = vld [vmem:[#allocation5 + $0x124] sm:$0xf]
        %v683 = vld [vmem:[#allocation5 + $0x128] sm:$0xf]
        %v684 = vld [vmem:[#allocation5 + $0x12c] sm:$0xf]
        %v685 = vld [vmem:[#allocation5 + $0x130] sm:$0xf]
        %v686 = vld [vmem:[#allocation5 + $0x134] sm:$0xf]
        %v687 = vld [vmem:[#allocation5 + $0x138] sm:$0xf]
        %v688 = vld [vmem:[#allocation5 + $0x13c] sm:$0xf]
        %v689 = vld [vmem:[#allocation5 + $0x140] sm:$0xf]
        %v690 = vld [vmem:[#allocation5 + $0x144] sm:$0xf]
        %v691 = vld [vmem:[#allocation5 + $0x148] sm:$0xf]
        %v692 = vld [vmem:[#allocation5 + $0x14c] sm:$0xf]
        %v693 = vld [vmem:[#allocation5 + $0x150] sm:$0xf]
        %v694 = vld [vmem:[#allocation5 + $0x154] sm:$0xf]
        %v695 = vld [vmem:[#allocation5 + $0x158] sm:$0xf]
        %v696 = vld [vmem:[#allocation5 + $0x15c] sm:$0xf]
        %v697 = vld [vmem:[#allocation5 + $0x160] sm:$0xf]
        %v698 = vld [vmem:[#allocation5 + $0x164] sm:$0xf]
        %v699 = vld [vmem:[#allocation5 + $0x168] sm:$0xf]
        %v700 = vld [vmem:[#allocation5 + $0x16c] sm:$0xf]
        %v701 = vld [vmem:[#allocation5 + $0x170] sm:$0xf]
        %v702 = vld [vmem:[#allocation5 + $0x174] sm:$0xf]
        %v703 = vld [vmem:[#allocation5 + $0x178] sm:$0xf]
        %v704 = vld [vmem:[#allocation5 + $0x17c] sm:$0xf]
        %v801 = vunpack.c.l.b16 %v609
        %v802 = vunpack.c.l.b16 %v610
        %v803 = vunpack.c.l.b16 %v611
        %v804 = vunpack.c.l.b16 %v612
        %v805 = vunpack.c.l.b16 %v613
        %v806 = vunpack.c.l.b16 %v614
        %v807 = vunpack.c.l.b16 %v615
        %v808 = vunpack.c.l.b16 %v616
        %v809 = vunpack.c.l.b16 %v617
        %v810 = vunpack.c.l.b16 %v618
        %v811 = vunpack.c.l.b16 %v619
        %v812 = vunpack.c.l.b16 %v620
        %v813 = vunpack.c.l.b16 %v621
        %v814 = vunpack.c.l.b16 %v622
        %v815 = vunpack.c.l.b16 %v623
        %v816 = vunpack.c.l.b16 %v624
        %v817 = vunpack.c.l.b16 %v625
        %v818 = vunpack.c.l.b16 %v626
        %v819 = vunpack.c.l.b16 %v627
        %v820 = vunpack.c.l.b16 %v628
        %v821 = vunpack.c.l.b16 %v629
        %v822 = vunpack.c.l.b16 %v630
        %v823 = vunpack.c.l.b16 %v631
        %v824 = vunpack.c.l.b16 %v632
        %v825 = vunpack.c.l.b16 %v633
        %v826 = vunpack.c.l.b16 %v634
        %v827 = vunpack.c.l.b16 %v635
        %v828 = vunpack.c.l.b16 %v636
        %v829 = vunpack.c.l.b16 %v637
        %v830 = vunpack.c.l.b16 %v638
        %v831 = vunpack.c.l.b16 %v639
        %v832 = vunpack.c.l.b16 %v640
        %v833 = vunpack.c.l.b16 %v641
        %v834 = vunpack.c.l.b16 %v642
        %v835 = vunpack.c.l.b16 %v643
        %v836 = vunpack.c.l.b16 %v644
        %v837 = vunpack.c.l.b16 %v645
        %v838 = vunpack.c.l.b16 %v646
        %v839 = vunpack.c.l.b16 %v647
        %v840 = vunpack.c.l.b16 %v648
        %v841 = vunpack.c.l.b16 %v649
        %v842 = vunpack.c.l.b16 %v650
        %v843 = vunpack.c.l.b16 %v651
        %v844 = vunpack.c.l.b16 %v652
        %v845 = vunpack.c.l.b16 %v653
        %v846 = vunpack.c.l.b16 %v654
        %v847 = vunpack.c.l.b16 %v655
        %v848 = vunpack.c.l.b16 %v656
        %v849 = vunpack.c.l.b16 %v657
        %v850 = vunpack.c.l.b16 %v658
        %v851 = vunpack.c.l.b16 %v659
        %v852 = vunpack.c.l.b16 %v660
        %v853 = vunpack.c.l.b16 %v661
        %v854 = vunpack.c.l.b16 %v662
        %v855 = vunpack.c.l.b16 %v663
        %v856 = vunpack.c.l.b16 %v664
        %v857 = vunpack.c.l.b16 %v665
        %v858 = vunpack.c.l.b16 %v666
        %v859 = vunpack.c.l.b16 %v667
        %v860 = vunpack.c.l.b16 %v668
        %v861 = vunpack.c.l.b16 %v669
        %v862 = vunpack.c.l.b16 %v670
        %v863 = vunpack.c.l.b16 %v671
        %v864 = vunpack.c.l.b16 %v672
        %v865 = vunpack.c.l.b16 %v673
        %v866 = vunpack.c.l.b16 %v674
        %v867 = vunpack.c.l.b16 %v675
        %v868 = vunpack.c.l.b16 %v676
        %v869 = vunpack.c.l.b16 %v677
        %v870 = vunpack.c.l.b16 %v678
        %v871 = vunpack.c.l.b16 %v679
        %v872 = vunpack.c.l.b16 %v680
        %v873 = vunpack.c.l.b16 %v681
        %v874 = vunpack.c.l.b16 %v682
        %v875 = vunpack.c.l.b16 %v683
        %v876 = vunpack.c.l.b16 %v684
        %v877 = vunpack.c.l.b16 %v685
        %v878 = vunpack.c.l.b16 %v686
        %v879 = vunpack.c.l.b16 %v687
        %v880 = vunpack.c.l.b16 %v688
        %v881 = vunpack.c.l.b16 %v689
        %v882 = vunpack.c.l.b16 %v690
        %v883 = vunpack.c.l.b16 %v691
        %v884 = vunpack.c.l.b16 %v692
        %v885 = vunpack.c.l.b16 %v693
        %v886 = vunpack.c.l.b16 %v694
        %v887 = vunpack.c.l.b16 %v695
        %v888 = vunpack.c.l.b16 %v696
        %v889 = vunpack.c.l.b16 %v697
        %v890 = vunpack.c.l.b16 %v698
        %v891 = vunpack.c.l.b16 %v699
        %v892 = vunpack.c.l.b16 %v700
        %v893 = vunpack.c.l.b16 %v701
        %v894 = vunpack.c.l.b16 %v702
        %v895 = vunpack.c.l.b16 %v703
        %v896 = vunpack.c.l.b16 %v704
        %v897 = vpack.c.b16 %v802, %v801
        %v898 = vpack.c.b16 %v804, %v803
        %v899 = vpack.c.b16 %v806, %v805
        %v900 = vpack.c.b16 %v808, %v807
        %v901 = vpack.c.b16 %v810, %v809
        %v902 = vpack.c.b16 %v812, %v811
        %v903 = vpack.c.b16 %v814, %v813
        %v904 = vpack.c.b16 %v816, %v815
        %v905 = vpack.c.b16 %v818, %v817
        %v906 = vpack.c.b16 %v820, %v819
        %v907 = vpack.c.b16 %v822, %v821
        %v908 = vpack.c.b16 %v824, %v823
        %v909 = vpack.c.b16 %v826, %v825
        %v910 = vpack.c.b16 %v828, %v827
        %v911 = vpack.c.b16 %v830, %v829
        %v912 = vpack.c.b16 %v832, %v831
        %v913 = vpack.c.b16 %v834, %v833
        %v914 = vpack.c.b16 %v836, %v835
        %v915 = vpack.c.b16 %v838, %v837
        %v916 = vpack.c.b16 %v840, %v839
        %v917 = vpack.c.b16 %v842, %v841
        %v918 = vpack.c.b16 %v844, %v843
        %v919 = vpack.c.b16 %v846, %v845
        %v920 = vpack.c.b16 %v848, %v847
        %v921 = vpack.c.b16 %v850, %v849
        %v922 = vpack.c.b16 %v852, %v851
        %v923 = vpack.c.b16 %v854, %v853
        %v924 = vpack.c.b16 %v856, %v855
        %v925 = vpack.c.b16 %v858, %v857
        %v926 = vpack.c.b16 %v860, %v859
        %v927 = vpack.c.b16 %v862, %v861
        %v928 = vpack.c.b16 %v864, %v863
        %v929 = vpack.c.b16 %v866, %v865
        %v930 = vpack.c.b16 %v868, %v867
        %v931 = vpack.c.b16 %v870, %v869
        %v932 = vpack.c.b16 %v872, %v871
        %v933 = vpack.c.b16 %v874, %v873
        %v934 = vpack.c.b16 %v876, %v875
        %v935 = vpack.c.b16 %v878, %v877
        %v936 = vpack.c.b16 %v880, %v879
        %v937 = vpack.c.b16 %v882, %v881
        %v938 = vpack.c.b16 %v884, %v883
        %v939 = vpack.c.b16 %v886, %v885
        %v940 = vpack.c.b16 %v888, %v887
        %v941 = vpack.c.b16 %v890, %v889
        %v942 = vpack.c.b16 %v892, %v891
        %v943 = vpack.c.b16 %v894, %v893
        %v944 = vpack.c.b16 %v896, %v895
        %993 = vmatprep.subr.bf16.mxu0 0
        %994 = vmatpush1.bf16.msra.mxu0 %v897
        %995 = vmatprep.subr.bf16.mxu0 0
        %996 = vmatpush1.bf16.msra.mxu0 %v898
        %997 = vmatprep.subr.bf16.mxu0 0
        %998 = vmatpush1.bf16.msra.mxu0 %v899
        %999 = vmatprep.subr.bf16.mxu0 0
        %1000 = vmatpush1.bf16.msra.mxu0 %v900
        %1001 = vmatprep.subr.bf16.mxu0 0
        %1002 = vmatpush1.bf16.msra.mxu0 %v901
        %1003 = vmatprep.subr.bf16.mxu0 0
        %1004 = vmatpush1.bf16.msra.mxu0 %v902
        %1005 = vmatprep.subr.bf16.mxu0 0
        %1006 = vmatpush1.bf16.msra.mxu0 %v903
        %1007 = vmatprep.subr.bf16.mxu0 0
        %1008 = vmatpush1.bf16.msra.mxu0 %v904
        %1009 = vmatprep.subr.bf16.mxu0 0
        %1010 = vmatpush1.bf16.msra.mxu0 %v905
        %1011 = vmatprep.subr.bf16.mxu0 0
        %1012 = vmatpush1.bf16.msra.mxu0 %v906
        %1013 = vmatprep.subr.bf16.mxu0 0
        %1014 = vmatpush1.bf16.msra.mxu0 %v907
        %1015 = vmatprep.subr.bf16.mxu0 0
        %1016 = vmatpush1.bf16.msra.mxu0 %v908
        %1017 = vmatprep.subr.bf16.mxu0 0
        %1018 = vmatpush1.bf16.msra.mxu0 %v909
        %1019 = vmatprep.subr.bf16.mxu0 0
        %1020 = vmatpush1.bf16.msra.mxu0 %v910
        %1021 = vmatprep.subr.bf16.mxu0 0
        %1022 = vmatpush1.bf16.msra.mxu0 %v911
        %1023 = vmatprep.subr.bf16.mxu0 0
        %1024 = vmatpush1.bf16.msra.mxu0 %v912
        %1025 = vmatprep.mubr.bf16.mxu0 %v604
        %1026 = vmatmul.mubr.bf16.gmra.mrb[0].mxu0 %v603
        %v1027 = vpop.f32.mrb[0].mxu0
        %v1028 = vadd.f32 0.0, %v1027
        %v1029 = vpop.f32.mrb[0].mxu0
        %v1030 = vpop.f32.mrb[0].mxu0
        %v1031 = vpop.f32.mrb[0].mxu0
        %1032 = vdwg.mxu0
        %1033 = vmatprep.subr.bf16.mxu0 0
        %1034 = vmatpush1.bf16.msra.mxu0 %v913
        %1035 = vmatprep.subr.bf16.mxu0 0
        %1036 = vmatpush1.bf16.msra.mxu0 %v914
        %1037 = vmatprep.subr.bf16.mxu0 0
        %1038 = vmatpush1.bf16.msra.mxu0 %v915
        %1039 = vmatprep.subr.bf16.mxu0 0
        %1040 = vmatpush1.bf16.msra.mxu0 %v916
        %1041 = vmatprep.subr.bf16.mxu0 0
        %1042 = vmatpush1.bf16.msra.mxu0 %v917
        %1043 = vmatprep.subr.bf16.mxu0 0
        %1044 = vmatpush1.bf16.msra.mxu0 %v918
        %1045 = vmatprep.subr.bf16.mxu0 0
        %1046 = vmatpush1.bf16.msra.mxu0 %v919
        %1047 = vmatprep.subr.bf16.mxu0 0
        %1048 = vmatpush1.bf16.msra.mxu0 %v920
        %1049 = vmatprep.subr.bf16.mxu0 0
        %1050 = vmatpush1.bf16.msra.mxu0 %v921
        %1051 = vmatprep.subr.bf16.mxu0 0
        %1052 = vmatpush1.bf16.msra.mxu0 %v922
        %1053 = vmatprep.subr.bf16.mxu0 0
        %1054 = vmatpush1.bf16.msra.mxu0 %v923
        %1055 = vmatprep.subr.bf16.mxu0 0
        %1056 = vmatpush1.bf16.msra.mxu0 %v924
        %1057 = vmatprep.subr.bf16.mxu0 0
        %1058 = vmatpush1.bf16.msra.mxu0 %v925
        %1059 = vmatprep.subr.bf16.mxu0 0
        %1060 = vmatpush1.bf16.msra.mxu0 %v926
        %1061 = vmatprep.subr.bf16.mxu0 0
        %1062 = vmatpush1.bf16.msra.mxu0 %v927
        %1063 = vmatprep.subr.bf16.mxu0 0
        %1064 = vmatpush1.bf16.msra.mxu0 %v928
        %1065 = vmatprep.mubr.bf16.mxu0 %v606
        %1066 = vmatmul.mubr.bf16.gmra.mrb[0].mxu0 %v605
        %v1067 = vpop.f32.mrb[0].mxu0
        %v1068 = vadd.f32 %v1028, %v1067
        %v1069 = vpop.f32.mrb[0].mxu0
        %v1070 = vpop.f32.mrb[0].mxu0
        %v1071 = vpop.f32.mrb[0].mxu0
        %1072 = vdwg.mxu0
        %1073 = vmatprep.subr.bf16.mxu0 0
        %1074 = vmatpush1.bf16.msra.mxu0 %v929
        %1075 = vmatprep.subr.bf16.mxu0 0
        %1076 = vmatpush1.bf16.msra.mxu0 %v930
        %1077 = vmatprep.subr.bf16.mxu0 0
        %1078 = vmatpush1.bf16.msra.mxu0 %v931
        %1079 = vmatprep.subr.bf16.mxu0 0
        %1080 = vmatpush1.bf16.msra.mxu0 %v932
        %1081 = vmatprep.subr.bf16.mxu0 0
        %1082 = vmatpush1.bf16.msra.mxu0 %v933
        %1083 = vmatprep.subr.bf16.mxu0 0
        %1084 = vmatpush1.bf16.msra.mxu0 %v934
        %1085 = vmatprep.subr.bf16.mxu0 0
        %1086 = vmatpush1.bf16.msra.mxu0 %v935
        %1087 = vmatprep.subr.bf16.mxu0 0
        %1088 = vmatpush1.bf16.msra.mxu0 %v936
        %1089 = vmatprep.subr.bf16.mxu0 0
        %1090 = vmatpush1.bf16.msra.mxu0 %v937
        %1091 = vmatprep.subr.bf16.mxu0 0
        %1092 = vmatpush1.bf16.msra.mxu0 %v938
        %1093 = vmatprep.subr.bf16.mxu0 0
        %1094 = vmatpush1.bf16.msra.mxu0 %v939
        %1095 = vmatprep.subr.bf16.mxu0 0
        %1096 = vmatpush1.bf16.msra.mxu0 %v940
        %1097 = vmatprep.subr.bf16.mxu0 0
        %1098 = vmatpush1.bf16.msra.mxu0 %v941
        %1099 = vmatprep.subr.bf16.mxu0 0
        %1100 = vmatpush1.bf16.msra.mxu0 %v942
        %1101 = vmatprep.subr.bf16.mxu0 0
        %1102 = vmatpush1.bf16.msra.mxu0 %v943
        %1103 = vmatprep.subr.bf16.mxu0 0
        %1104 = vmatpush1.bf16.msra.mxu0 %v944
        %1105 = vmatprep.mubr.bf16.mxu0 %v608
        %1106 = vmatmul.mubr.bf16.gmra.mrb[0].mxu0 %v607
        %v1107 = vpop.f32.mrb[0].mxu0
        %v1108 = vadd.f32 %v1068, %v1107
        %v1109 = vpop.f32.mrb[0].mxu0
        %v1110 = vpop.f32.mrb[0].mxu0
        %v1111 = vpop.f32.mrb[0].mxu0
        %1112 = vdwg.mxu0
        %v1113 = vrot.slane %v1108, 4
        %v1114 = vadd.f32 %v1108, %v1113
        %v1115 = vrot.slane %v1114, 2
        %v1116 = vadd.f32 %v1114, %v1115
        %v1117 = vrot.slane %v1116, 1
        %v1118 = vadd.f32 %v1116, %v1117
        %v1119 = vrcp.pop 8.0
        %v1120 = vmul.f32 %v1118, %v1119
        %v1121 = vmul.f32 %v1108, %v1108
        %v1122 = vrot.slane %v1121, 4
        %v1123 = vadd.f32 %v1121, %v1122
        %v1124 = vrot.slane %v1123, 2
        %v1125 = vadd.f32 %v1123, %v1124
        %v1126 = vrot.slane %v1125, 1
        %v1127 = vadd.f32 %v1125, %v1126
        %v1128 = vmul.f32 %v1127, %v1119
        %v1129 = vmul.f32 %v1120, %v1120
        %v1130 = vsub.f32 %v1128, %v1129
        %v1131 = vmax.f32 %v1130, 0.0
        %v1132 = vld [vmem:[%s2] sm:$0x1]
        %v1133 = vadd.f32 %v1131, 1e-05
        %v1134 = vrsqrt.pop %v1133
        %v1135 = vmul.f32 %v1132, %v1134
        %v1136 = vld [vmem:[#allocation7] sm:$0x1]
        %v1137 = vmul.f32 %v1120, %v1135
        %v1138 = vsub.f32 %v1136, %v1137
        %v1140 = vlaneseq
        %v1141 = vshrl.u32 %v1140, 7
        %v1142 = vsub.s32 0, %v1141
        %v1143 = vrot.slane %v1135, %v1142
        %v1145 = vmul.f32 %v1108, %v1143
        %v1147 = vlaneseq
        %v1148 = vshrl.u32 %v1147, 7
        %v1149 = vsub.s32 0, %v1148
        %v1150 = vrot.slane %v1138, %v1149
        %v1152 = vadd.f32 %v1145, %v1150
        %v1153 = vmax.f32 %v1152, 0.0
        %v1154 = vpack.c.bf16 %v1153, %v1153
        %v1155 = vld [vmem:[#allocation8] sm:$0xf]
        %v1156 = vld [vmem:[#allocation8 + $0x4] sm:$0xf]
        %v1157 = vld [vmem:[#allocation8 + $0x8] sm:$0xf]
        %v1158 = vld [vmem:[#allocation8 + $0xc] sm:$0xf]
        %v1159 = vld [vmem:[#allocation8 + $0x10] sm:$0xf]
        %v1160 = vld [vmem:[#allocation8 + $0x14] sm:$0xf]
        %v1161 = vld [vmem:[#allocation8 + $0x18] sm:$0xf]
        %v1162 = vld [vmem:[#allocation8 + $0x1c] sm:$0xf]
        %v1163 = vld [vmem:[#allocation8 + $0x20] sm:$0xf]
        %v1164 = vld [vmem:[#allocation8 + $0x24] sm:$0xf]
        %v1165 = vld [vmem:[#allocation8 + $0x28] sm:$0xf]
        %v1166 = vld [vmem:[#allocation8 + $0x2c] sm:$0xf]
        %v1167 = vld [vmem:[#allocation8 + $0x30] sm:$0xf]
        %v1168 = vld [vmem:[#allocation8 + $0x34] sm:$0xf]
        %v1169 = vld [vmem:[#allocation8 + $0x38] sm:$0xf]
        %v1170 = vld [vmem:[#allocation8 + $0x3c] sm:$0xf]
        %v1187 = vunpack.c.l.b16 %v1155
        %v1188 = vunpack.c.l.b16 %v1156
        %v1189 = vunpack.c.l.b16 %v1157
        %v1190 = vunpack.c.l.b16 %v1158
        %v1191 = vunpack.c.l.b16 %v1159
        %v1192 = vunpack.c.l.b16 %v1160
        %v1193 = vunpack.c.l.b16 %v1161
        %v1194 = vunpack.c.l.b16 %v1162
        %v1195 = vunpack.c.l.b16 %v1163
        %v1196 = vunpack.c.l.b16 %v1164
        %v1197 = vunpack.c.l.b16 %v1165
        %v1198 = vunpack.c.l.b16 %v1166
        %v1199 = vunpack.c.l.b16 %v1167
        %v1200 = vunpack.c.l.b16 %v1168
        %v1201 = vunpack.c.l.b16 %v1169
        %v1202 = vunpack.c.l.b16 %v1170
        %v1203 = vpack.c.b16 %v1188, %v1187
        %v1204 = vpack.c.b16 %v1190, %v1189
        %v1205 = vpack.c.b16 %v1192, %v1191
        %v1206 = vpack.c.b16 %v1194, %v1193
        %v1207 = vpack.c.b16 %v1196, %v1195
        %v1208 = vpack.c.b16 %v1198, %v1197
        %v1209 = vpack.c.b16 %v1200, %v1199
        %v1210 = vpack.c.b16 %v1202, %v1201
        %1219 = vmatprep.subr.bf16.mxu0 0
        %1220 = vmatpush1.bf16.msra.mxu0 %v1203
        %1221 = vmatprep.subr.bf16.mxu0 0
        %1222 = vmatpush1.bf16.msra.mxu0 %v1204
        %1223 = vmatprep.subr.bf16.mxu0 0
        %1224 = vmatpush1.bf16.msra.mxu0 %v1205
        %1225 = vmatprep.subr.bf16.mxu0 0
        %1226 = vmatpush1.bf16.msra.mxu0 %v1206
        %1227 = vmatprep.subr.bf16.mxu0 0
        %1228 = vmatpush1.bf16.msra.mxu0 %v1207
        %1229 = vmatprep.subr.bf16.mxu0 0
        %1230 = vmatpush1.bf16.msra.mxu0 %v1208
        %1231 = vmatprep.subr.bf16.mxu0 0
        %1232 = vmatpush1.bf16.msra.mxu0 %v1209
        %1233 = vmatprep.subr.bf16.mxu0 0
        %1234 = vmatpush1.bf16.msra.mxu0 %v1210
        %1235 = vmatprep.subr.bf16.mxu0 0
        %1236 = vmatpush1.bf16.msra.mxu0 0
        %1237 = vmatprep.subr.bf16.mxu0 0
        %1238 = vmatpush1.bf16.msra.mxu0 0
        %1239 = vmatprep.subr.bf16.mxu0 0
        %1240 = vmatpush1.bf16.msra.mxu0 0
        %1241 = vmatprep.subr.bf16.mxu0 0
        %1242 = vmatpush1.bf16.msra.mxu0 0
        %1243 = vmatprep.subr.bf16.mxu0 0
        %1244 = vmatpush1.bf16.msra.mxu0 0
        %1245 = vmatprep.subr.bf16.mxu0 0
        %1246 = vmatpush1.bf16.msra.mxu0 0
        %1247 = vmatprep.subr.bf16.mxu0 0
        %1248 = vmatpush1.bf16.msra.mxu0 0
        %1249 = vmatprep.subr.bf16.mxu0 0
        %1250 = vmatpush1.bf16.msra.mxu0 0
        %1251 = vmatprep.mubr.bf16.mxu0 0
        %1252 = vmatmul.mubr.bf16.gmra.mrb[0].mxu0 %v1154
        %v1253 = vpop.f32.mrb[0].mxu0
        %v1254 = vadd.f32 0.0, %v1253
        %v1255 = vpop.f32.mrb[0].mxu0
        %v1256 = vpop.f32.mrb[0].mxu0
        %v1257 = vpop.f32.mrb[0].mxu0
        %1258 = vdwg.mxu0
        %v1259 = vrot.slane %v1254, 4
        %v1260 = vadd.f32 %v1254, %v1259
        %v1261 = vrot.slane %v1260, 2
        %v1262 = vadd.f32 %v1260, %v1261
        %v1263 = vrot.slane %v1262, 1
        %v1264 = vadd.f32 %v1262, %v1263
        %v1265 = vmul.f32 %v1264, %v1119
        %v1266 = vmul.f32 %v1254, %v1254
        %v1267 = vrot.slane %v1266, 4
        %v1268 = vadd.f32 %v1266, %v1267
        %v1269 = vrot.slane %v1268, 2
        %v1270 = vadd.f32 %v1268, %v1269
        %v1271 = vrot.slane %v1270, 1
        %v1272 = vadd.f32 %v1270, %v1271
        %v1273 = vmul.f32 %v1272, %v1119
        %v1274 = vmul.f32 %v1265, %v1265
        %v1275 = vsub.f32 %v1273, %v1274
        %v1276 = vmax.f32 %v1275, 0.0
        %v1277 = vld [vmem:[%s5] sm:$0x1]
        %v1278 = vadd.f32 %v1276, 1e-05
        %v1279 = vrsqrt.pop %v1278
        %v1280 = vmul.f32 %v1277, %v1279
        %v1281 = vld [vmem:[%s6] sm:$0x1]
        %v1282 = vmul.f32 %v1265, %v1280
        %v1283 = vsub.f32 %v1281, %v1282
        %v1285 = vlaneseq
        %v1286 = vshrl.u32 %v1285, 7
        %v1287 = vsub.s32 0, %v1286
        %v1288 = vrot.slane %v1280, %v1287
        %v1290 = vmul.f32 %v1254, %v1288
        %v1292 = vlaneseq
        %v1293 = vshrl.u32 %v1292, 7
        %v1294 = vsub.s32 0, %v1293
        %v1295 = vrot.slane %v1283, %v1294
        %v1297 = vadd.f32 %v1290, %v1295
        %v1298 = vmax.f32 %v1297, 0.0
        %v1299 = vpack.c.bf16 %v1298, %v1298
        %v1300 = vld [vmem:[#allocation10] sm:$0xf]
        %v1301 = vld [vmem:[#allocation10 + $0x4] sm:$0xf]
        %v1302 = vld [vmem:[#allocation10 + $0x8] sm:$0xf]
        %v1303 = vld [vmem:[#allocation10 + $0xc] sm:$0xf]
        %v1304 = vld [vmem:[#allocation10 + $0x10] sm:$0xf]
        %v1305 = vld [vmem:[#allocation10 + $0x14] sm:$0xf]
        %v1306 = vld [vmem:[#allocation10 + $0x18] sm:$0xf]
        %v1307 = vld [vmem:[#allocation10 + $0x1c] sm:$0xf]
        %v1308 = vld [vmem:[#allocation10 + $0x20] sm:$0xf]
        %v1309 = vld [vmem:[#allocation10 + $0x24] sm:$0xf]
        %v1310 = vld [vmem:[#allocation10 + $0x28] sm:$0xf]
        %v1311 = vld [vmem:[#allocation10 + $0x2c] sm:$0xf]
        %v1312 = vld [vmem:[#allocation10 + $0x30] sm:$0xf]
        %v1313 = vld [vmem:[#allocation10 + $0x34] sm:$0xf]
        %v1314 = vld [vmem:[#allocation10 + $0x38] sm:$0xf]
        %v1315 = vld [vmem:[#allocation10 + $0x3c] sm:$0xf]
        %v1332 = vunpack.c.l.b16 %v1300
        %v1333 = vunpack.c.l.b16 %v1301
        %v1334 = vunpack.c.l.b16 %v1302
        %v1335 = vunpack.c.l.b16 %v1303
        %v1336 = vunpack.c.l.b16 %v1304
        %v1337 = vunpack.c.l.b16 %v1305
        %v1338 = vunpack.c.l.b16 %v1306
        %v1339 = vunpack.c.l.b16 %v1307
        %v1340 = vunpack.c.l.b16 %v1308
        %v1341 = vunpack.c.l.b16 %v1309
        %v1342 = vunpack.c.l.b16 %v1310
        %v1343 = vunpack.c.l.b16 %v1311
        %v1344 = vunpack.c.l.b16 %v1312
        %v1345 = vunpack.c.l.b16 %v1313
        %v1346 = vunpack.c.l.b16 %v1314
        %v1347 = vunpack.c.l.b16 %v1315
        %v1348 = vpack.c.b16 %v1333, %v1332
        %v1349 = vpack.c.b16 %v1335, %v1334
        %v1350 = vpack.c.b16 %v1337, %v1336
        %v1351 = vpack.c.b16 %v1339, %v1338
        %v1352 = vpack.c.b16 %v1341, %v1340
        %v1353 = vpack.c.b16 %v1343, %v1342
        %v1354 = vpack.c.b16 %v1345, %v1344
        %v1355 = vpack.c.b16 %v1347, %v1346
        %1364 = vmatprep.subr.bf16.mxu0 0
        %1365 = vmatpush1.bf16.msra.mxu0 %v1348
        %1366 = vmatprep.subr.bf16.mxu0 0
        %1367 = vmatpush1.bf16.msra.mxu0 %v1349
        %1368 = vmatprep.subr.bf16.mxu0 0
        %1369 = vmatpush1.bf16.msra.mxu0 %v1350
        %1370 = vmatprep.subr.bf16.mxu0 0
        %1371 = vmatpush1.bf16.msra.mxu0 %v1351
        %1372 = vmatprep.subr.bf16.mxu0 0
        %1373 = vmatpush1.bf16.msra.mxu0 %v1352
        %1374 = vmatprep.subr.bf16.mxu0 0
        %1375 = vmatpush1.bf16.msra.mxu0 %v1353
        %1376 = vmatprep.subr.bf16.mxu0 0
        %1377 = vmatpush1.bf16.msra.mxu0 %v1354
        %1378 = vmatprep.subr.bf16.mxu0 0
        %1379 = vmatpush1.bf16.msra.mxu0 %v1355
        %1380 = vmatprep.subr.bf16.mxu0 0
        %1381 = vmatpush1.bf16.msra.mxu0 0
        %1382 = vmatprep.subr.bf16.mxu0 0
        %1383 = vmatpush1.bf16.msra.mxu0 0
        %1384 = vmatprep.subr.bf16.mxu0 0
        %1385 = vmatpush1.bf16.msra.mxu0 0
        %1386 = vmatprep.subr.bf16.mxu0 0
        %1387 = vmatpush1.bf16.msra.mxu0 0
        %1388 = vmatprep.subr.bf16.mxu0 0
        %1389 = vmatpush1.bf16.msra.mxu0 0
        %1390 = vmatprep.subr.bf16.mxu0 0
        %1391 = vmatpush1.bf16.msra.mxu0 0
        %1392 = vmatprep.subr.bf16.mxu0 0
        %1393 = vmatpush1.bf16.msra.mxu0 0
        %1394 = vmatprep.subr.bf16.mxu0 0
        %1395 = vmatpush1.bf16.msra.mxu0 0
        %1396 = vmatprep.mubr.bf16.mxu0 0
        %1397 = vmatmul.mubr.bf16.gmra.mrb[0].mxu0 %v1299
        %v1398 = vpop.f32.mrb[0].mxu0
        %v1399 = vadd.f32 0.0, %v1398
        %v1400 = vpop.f32.mrb[0].mxu0
        %v1401 = vpop.f32.mrb[0].mxu0
        %v1402 = vpop.f32.mrb[0].mxu0
        %1403 = vdwg.mxu0
        %v1404 = vrot.slane %v1399, 4
        %v1405 = vadd.f32 %v1399, %v1404
        %v1406 = vrot.slane %v1405, 2
        %v1407 = vadd.f32 %v1405, %v1406
        %v1408 = vrot.slane %v1407, 1
        %v1409 = vadd.f32 %v1407, %v1408
        %v1410 = vmul.f32 %v1409, %v1119
        %v1411 = vmul.f32 %v1399, %v1399
        %v1412 = vrot.slane %v1411, 4
        %v1413 = vadd.f32 %v1411, %v1412
        %v1414 = vrot.slane %v1413, 2
        %v1415 = vadd.f32 %v1413, %v1414
        %v1416 = vrot.slane %v1415, 1
        %v1417 = vadd.f32 %v1415, %v1416
        %v1418 = vmul.f32 %v1417, %v1119
        %v1419 = vmul.f32 %v1410, %v1410
        %v1420 = vsub.f32 %v1418, %v1419
        %v1421 = vmax.f32 %v1420, 0.0
        %v1422 = vld [vmem:[%s8] sm:$0x1]
        %v1423 = vadd.f32 %v1421, 1e-05
        %v1424 = vrsqrt.pop %v1423
        %v1425 = vmul.f32 %v1422, %v1424
        %v1426 = vld [vmem:[%s9] sm:$0x1]
        %v1427 = vmul.f32 %v1410, %v1425
        %v1428 = vsub.f32 %v1426, %v1427
        %v1430 = vlaneseq
        %v1431 = vshrl.u32 %v1430, 7
        %v1432 = vsub.s32 0, %v1431
        %v1433 = vrot.slane %v1425, %v1432
        %v1435 = vmul.f32 %v1399, %v1433
        %v1437 = vlaneseq
        %v1438 = vshrl.u32 %v1437, 7
        %v1439 = vsub.s32 0, %v1438
        %v1440 = vrot.slane %v1428, %v1439
        %v1442 = vadd.f32 %v1435, %v1440
        %v1443 = vmax.f32 %v1442, 0.0
        %v1444 = vpack.c.bf16 %v1443, %v1443
        %v1445 = vld [vmem:[#allocation11] sm:$0xff]
        %v1446 = vld [vmem:[#allocation11 + $0x8] sm:$0xff]
        %v1447 = vld [vmem:[#allocation11 + $0x10] sm:$0xff]
        %v1448 = vld [vmem:[#allocation11 + $0x18] sm:$0xff]
        %v1449 = vld [vmem:[#allocation11 + $0x20] sm:$0xff]
        %v1450 = vld [vmem:[#allocation11 + $0x28] sm:$0xff]
        %v1451 = vld [vmem:[#allocation11 + $0x30] sm:$0xff]
        %v1452 = vld [vmem:[#allocation11 + $0x38] sm:$0xff]
        %v1453 = vld [vmem:[#allocation11 + $0x40] sm:$0xff]
        %v1454 = vld [vmem:[#allocation11 + $0x48] sm:$0xff]
        %v1455 = vld [vmem:[#allocation11 + $0x50] sm:$0xff]
        %v1456 = vld [vmem:[#allocation11 + $0x58] sm:$0xff]
        %v1457 = vld [vmem:[#allocation11 + $0x60] sm:$0xff]
        %v1458 = vld [vmem:[#allocation11 + $0x68] sm:$0xff]
        %v1459 = vld [vmem:[#allocation11 + $0x70] sm:$0xff]
        %v1460 = vld [vmem:[#allocation11 + $0x78] sm:$0xff]
        %v1477 = vunpack.c.l.b16 %v1445
        %v1478 = vunpack.c.h.b16 %v1445
        %v1479 = vunpack.c.l.b16 %v1446
        %v1480 = vunpack.c.h.b16 %v1446
        %v1481 = vunpack.c.l.b16 %v1447
        %v1482 = vunpack.c.h.b16 %v1447
        %v1483 = vunpack.c.l.b16 %v1448
        %v1484 = vunpack.c.h.b16 %v1448
        %v1485 = vunpack.c.l.b16 %v1449
        %v1486 = vunpack.c.h.b16 %v1449
        %v1487 = vunpack.c.l.b16 %v1450
        %v1488 = vunpack.c.h.b16 %v1450
        %v1489 = vunpack.c.l.b16 %v1451
        %v1490 = vunpack.c.h.b16 %v1451
        %v1491 = vunpack.c.l.b16 %v1452
        %v1492 = vunpack.c.h.b16 %v1452
        %v1493 = vunpack.c.l.b16 %v1453
        %v1494 = vunpack.c.h.b16 %v1453
        %v1495 = vunpack.c.l.b16 %v1454
        %v1496 = vunpack.c.h.b16 %v1454
        %v1497 = vunpack.c.l.b16 %v1455
        %v1498 = vunpack.c.h.b16 %v1455
        %v1499 = vunpack.c.l.b16 %v1456
        %v1500 = vunpack.c.h.b16 %v1456
        %v1501 = vunpack.c.l.b16 %v1457
        %v1502 = vunpack.c.h.b16 %v1457
        %v1503 = vunpack.c.l.b16 %v1458
        %v1504 = vunpack.c.h.b16 %v1458
        %v1505 = vunpack.c.l.b16 %v1459
        %v1506 = vunpack.c.h.b16 %v1459
        %v1507 = vunpack.c.l.b16 %v1460
        %v1508 = vunpack.c.h.b16 %v1460
        %v1509 = vpack.c.b16 %v1479, %v1477
        %v1510 = vpack.c.b16 %v1480, %v1478
        %v1511 = vpack.c.b16 %v1483, %v1481
        %v1512 = vpack.c.b16 %v1484, %v1482
        %v1513 = vpack.c.b16 %v1487, %v1485
        %v1514 = vpack.c.b16 %v1488, %v1486
        %v1515 = vpack.c.b16 %v1491, %v1489
        %v1516 = vpack.c.b16 %v1492, %v1490
        %v1517 = vpack.c.b16 %v1495, %v1493
        %v1518 = vpack.c.b16 %v1496, %v1494
        %v1519 = vpack.c.b16 %v1499, %v1497
        %v1520 = vpack.c.b16 %v1500, %v1498
        %v1521 = vpack.c.b16 %v1503, %v1501
        %v1522 = vpack.c.b16 %v1504, %v1502
        %v1523 = vpack.c.b16 %v1507, %v1505
        %v1524 = vpack.c.b16 %v1508, %v1506
        %1541 = vmatprep.subr.bf16.mxu0 %v1510
        %1542 = vmatpush1.bf16.msra.mxu0 %v1509
        %1543 = vmatprep.subr.bf16.mxu0 %v1512
        %1544 = vmatpush1.bf16.msra.mxu0 %v1511
        %1545 = vmatprep.subr.bf16.mxu0 %v1514
        %1546 = vmatpush1.bf16.msra.mxu0 %v1513
        %1547 = vmatprep.subr.bf16.mxu0 %v1516
        %1548 = vmatpush1.bf16.msra.mxu0 %v1515
        %1549 = vmatprep.subr.bf16.mxu0 %v1518
        %1550 = vmatpush1.bf16.msra.mxu0 %v1517
        %1551 = vmatprep.subr.bf16.mxu0 %v1520
        %1552 = vmatpush1.bf16.msra.mxu0 %v1519
        %1553 = vmatprep.subr.bf16.mxu0 %v1522
        %1554 = vmatpush1.bf16.msra.mxu0 %v1521
        %1555 = vmatprep.subr.bf16.mxu0 %v1524
        %1556 = vmatpush1.bf16.msra.mxu0 %v1523
        %1557 = vmatprep.subr.bf16.mxu0 0
        %1558 = vmatpush1.bf16.msra.mxu0 0
        %1559 = vmatprep.subr.bf16.mxu0 0
        %1560 = vmatpush1.bf16.msra.mxu0 0
        %1561 = vmatprep.subr.bf16.mxu0 0
        %1562 = vmatpush1.bf16.msra.mxu0 0
        %1563 = vmatprep.subr.bf16.mxu0 0
        %1564 = vmatpush1.bf16.msra.mxu0 0
        %1565 = vmatprep.subr.bf16.mxu0 0
        %1566 = vmatpush1.bf16.msra.mxu0 0
        %1567 = vmatprep.subr.bf16.mxu0 0
        %1568 = vmatpush1.bf16.msra.mxu0 0
        %1569 = vmatprep.subr.bf16.mxu0 0
        %1570 = vmatpush1.bf16.msra.mxu0 0
        %1571 = vmatprep.subr.bf16.mxu0 0
        %1572 = vmatpush1.bf16.msra.mxu0 0
        %1573 = vmatprep.mubr.bf16.mxu0 0
        %1574 = vmatmul.mubr.bf16.gmra.mrb[0].mxu0 %v1444
        %v1575 = vpop.f32.mrb[0].mxu0
        %v1576 = vadd.f32 0.0, %v1575
        %v1577 = vpop.f32.mrb[0].mxu0
        %v1578 = vadd.f32 0.0, %v1577
        %v1579 = vpop.f32.mrb[0].mxu0
        %v1580 = vpop.f32.mrb[0].mxu0
        %1581 = vdwg.mxu0
        %v1582 = vrot.slane %v1576, 4
        %v1583 = vadd.f32 %v1576, %v1582
        %v1584 = vrot.slane %v1583, 2
        %v1585 = vadd.f32 %v1583, %v1584
        %v1586 = vrot.slane %v1585, 1
        %v1587 = vadd.f32 %v1585, %v1586
        %v1588 = vrot.slane %v1578, 4
        %v1589 = vadd.f32 %v1578, %v1588
        %v1590 = vrot.slane %v1589, 2
        %v1591 = vadd.f32 %v1589, %v1590
        %v1592 = vrot.slane %v1591, 1
        %v1593 = vadd.f32 %v1591, %v1592
        %v1594 = vmul.f32 %v1587, %v1119
        %v1595 = vmul.f32 %v1593, %v1119
        %v1596 = vmul.f32 %v1576, %v1576
        %v1597 = vmul.f32 %v1578, %v1578
        %v1598 = vrot.slane %v1596, 4
        %v1599 = vadd.f32 %v1596, %v1598
        %v1600 = vrot.slane %v1599, 2
        %v1601 = vadd.f32 %v1599, %v1600
        %v1602 = vrot.slane %v1601, 1
        %v1603 = vadd.f32 %v1601, %v1602
        %v1604 = vrot.slane %v1597, 4
        %v1605 = vadd.f32 %v1597, %v1604
        %v1606 = vrot.slane %v1605, 2
        %v1607 = vadd.f32 %v1605, %v1606
        %v1608 = vrot.slane %v1607, 1
        %v1609 = vadd.f32 %v1607, %v1608
        %v1610 = vmul.f32 %v1603, %v1119
        %v1611 = vmul.f32 %v1609, %v1119
        %v1612 = vmul.f32 %v1594, %v1594
        %v1613 = vmul.f32 %v1595, %v1595
        %v1614 = vsub.f32 %v1610, %v1612
        %v1615 = vsub.f32 %v1611, %v1613
        %v1616 = vmax.f32 %v1614, 0.0
        %v1617 = vmax.f32 %v1615, 0.0
        %v1618 = vld [vmem:[%s11] sm:$0x3]
        %v1619 = vadd.f32 %v1616, 1e-05
        %v1620 = vadd.f32 %v1617, 1e-05
        %v1621 = vrsqrt.pop %v1619
        %v1622 = vrsqrt.pop %v1620
        %v1625 = vcombine.low %v1621, %v1622
        %v1627 = vunpack.c.l.s4 1966171168
        %v1628 = vunpack.c.0.s8 %v1627
        %v1629 = vlaneseq
        %v1630 = vshrl.u32 %v1629, 7
        %v1631 = vsub.s32 %v1628, %v1630
        %v1632 = vrot.slane %v1625, %v1631
        %v1634 = vunpack.c.l.s4 1966171168
        %v1635 = vunpack.c.0.s8 %v1634
        %v1636 = vlaneseq
        %v1637 = vshrl.u32 %v1636, 7
        %v1638 = vsub.s32 %v1635, %v1637
        %v1639 = vrot.slane %v1632, %v1638
        %v1641 = vmul.f32 %v1618, %v1639
        %v1642 = vld [vmem:[%s12] sm:$0x3]
        %v1644 = vlaneseq
        %v1645 = vshrl.u32 %v1644, 7
        %v1646 = vsub.s32 0, %v1645
        %v1647 = vrot.slane %v1641, %v1646
        %v1648 = vlaneseq
        %v1649 = vshrl.u32 %v1648, 7
        %v1650 = vsub.s32 1, %v1649
        %v1651 = vrot.slane %v1641, %v1650
        %v1654 = vmul.f32 %v1594, %v1647
        %v1655 = vmul.f32 %v1595, %v1651
        %v1658 = vcombine.low %v1654, %v1655
        %v1660 = vunpack.c.l.s4 1966171168
        %v1661 = vunpack.c.0.s8 %v1660
        %v1662 = vlaneseq
        %v1663 = vshrl.u32 %v1662, 7
        %v1664 = vsub.s32 %v1661, %v1663
        %v1665 = vrot.slane %v1658, %v1664
        %v1667 = vunpack.c.l.s4 1966171168
        %v1668 = vunpack.c.0.s8 %v1667
        %v1669 = vlaneseq
        %v1670 = vshrl.u32 %v1669, 7
        %v1671 = vsub.s32 %v1668, %v1670
        %v1672 = vrot.slane %v1665, %v1671
        %v1674 = vsub.f32 %v1642, %v1672
        %v1675 = vmul.f32 %v1576, %v1647
        %v1676 = vmul.f32 %v1578, %v1651
        %v1678 = vlaneseq
        %v1679 = vshrl.u32 %v1678, 7
        %v1680 = vsub.s32 0, %v1679
        %v1681 = vrot.slane %v1674, %v1680
        %v1682 = vlaneseq
        %v1683 = vshrl.u32 %v1682, 7
        %v1684 = vsub.s32 1, %v1683
        %v1685 = vrot.slane %v1674, %v1684
        %v1688 = vadd.f32 %v1675, %v1681
        %v1689 = vadd.f32 %v1676, %v1685
        %v1690 = vmax.f32 %v1688, 0.0
        %v1691 = vmax.f32 %v1689, 0.0
        %v1692 = vpack.c.bf16 %v1690, %v1690
        %v1693 = vpack.c.bf16 %v1691, %v1691
        %v1694 = vld [vmem:[#allocation13] sm:$0xff]
        %v1695 = vld [vmem:[#allocation13 + $0x8] sm:$0xff]
        %v1696 = vld [vmem:[#allocation13 + $0x10] sm:$0xff]
        %v1697 = vld [vmem:[#allocation13 + $0x18] sm:$0xff]
        %v1698 = vld [vmem:[#allocation13 + $0x20] sm:$0xff]
        %v1699 = vld [vmem:[#allocation13 + $0x28] sm:$0xff]
        %v1700 = vld [vmem:[#allocation13 + $0x30] sm:$0xff]
        %v1701 = vld [vmem:[#allocation13 + $0x38] sm:$0xff]
        %v1702 = vld [vmem:[#allocation13 + $0x40] sm:$0xff]
        %v1703 = vld [vmem:[#allocation13 + $0x48] sm:$0xff]
        %v1704 = vld [vmem:[#allocation13 + $0x50] sm:$0xff]
        %v1705 = vld [vmem:[#allocation13 + $0x58] sm:$0xff]
        %v1706 = vld [vmem:[#allocation13 + $0x60] sm:$0xff]
        %v1707 = vld [vmem:[#allocation13 + $0x68] sm:$0xff]
        %v1708 = vld [vmem:[#allocation13 + $0x70] sm:$0xff]
        %v1709 = vld [vmem:[#allocation13 + $0x78] sm:$0xff]
        %v1710 = vld [vmem:[#allocation13 + $0x80] sm:$0xff]
        %v1711 = vld [vmem:[#allocation13 + $0x88] sm:$0xff]
        %v1712 = vld [vmem:[#allocation13 + $0x90] sm:$0xff]
        %v1713 = vld [vmem:[#allocation13 + $0x98] sm:$0xff]
        %v1714 = vld [vmem:[#allocation13 + $0xa0] sm:$0xff]
        %v1715 = vld [vmem:[#allocation13 + $0xa8] sm:$0xff]
        %v1716 = vld [vmem:[#allocation13 + $0xb0] sm:$0xff]
        %v1717 = vld [vmem:[#allocation13 + $0xb8] sm:$0xff]
        %v1718 = vld [vmem:[#allocation13 + $0xc0] sm:$0xff]
        %v1719 = vld [vmem:[#allocation13 + $0xc8] sm:$0xff]
        %v1720 = vld [vmem:[#allocation13 + $0xd0] sm:$0xff]
        %v1721 = vld [vmem:[#allocation13 + $0xd8] sm:$0xff]
        %v1722 = vld [vmem:[#allocation13 + $0xe0] sm:$0xff]
        %v1723 = vld [vmem:[#allocation13 + $0xe8] sm:$0xff]
        %v1724 = vld [vmem:[#allocation13 + $0xf0] sm:$0xff]
        %v1725 = vld [vmem:[#allocation13 + $0xf8] sm:$0xff]
        %v1726 = vld [vmem:[#allocation13 + $0x100] sm:$0xff]
        %v1727 = vld [vmem:[#allocation13 + $0x108] sm:$0xff]
        %v1728 = vld [vmem:[#allocation13 + $0x110] sm:$0xff]
        %v1729 = vld [vmem:[#allocation13 + $0x118] sm:$0xff]
        %v1730 = vld [vmem:[#allocation13 + $0x120] sm:$0xff]
        %v1731 = vld [vmem:[#allocation13 + $0x128] sm:$0xff]
        %v1732 = vld [vmem:[#allocation13 + $0x130] sm:$0xff]
        %v1733 = vld [vmem:[#allocation13 + $0x138] sm:$0xff]
        %v1734 = vld [vmem:[#allocation13 + $0x140] sm:$0xff]
        %v1735 = vld [vmem:[#allocation13 + $0x148] sm:$0xff]
        %v1736 = vld [vmem:[#allocation13 + $0x150] sm:$0xff]
        %v1737 = vld [vmem:[#allocation13 + $0x158] sm:$0xff]
        %v1738 = vld [vmem:[#allocation13 + $0x160] sm:$0xff]
        %v1739 = vld [vmem:[#allocation13 + $0x168] sm:$0xff]
        %v1740 = vld [vmem:[#allocation13 + $0x170] sm:$0xff]
        %v1741 = vld [vmem:[#allocation13 + $0x178] sm:$0xff]
        %v1742 = vld [vmem:[#allocation13 + $0x180] sm:$0xff]
        %v1743 = vld [vmem:[#allocation13 + $0x188] sm:$0xff]
        %v1744 = vld [vmem:[#allocation13 + $0x190] sm:$0xff]
        %v1745 = vld [vmem:[#allocation13 + $0x198] sm:$0xff]
        %v1746 = vld [vmem:[#allocation13 + $0x1a0] sm:$0xff]
        %v1747 = vld [vmem:[#allocation13 + $0x1a8] sm:$0xff]
        %v1748 = vld [vmem:[#allocation13 + $0x1b0] sm:$0xff]
        %v1749 = vld [vmem:[#allocation13 + $0x1b8] sm:$0xff]
        %v1750 = vld [vmem:[#allocation13 + $0x1c0] sm:$0xff]
        %v1751 = vld [vmem:[#allocation13 + $0x1c8] sm:$0xff]
        %v1752 = vld [vmem:[#allocation13 + $0x1d0] sm:$0xff]
        %v1753 = vld [vmem:[#allocation13 + $0x1d8] sm:$0xff]
        %v1754 = vld [vmem:[#allocation13 + $0x1e0] sm:$0xff]
        %v1755 = vld [vmem:[#allocation13 + $0x1e8] sm:$0xff]
        %v1756 = vld [vmem:[#allocation13 + $0x1f0] sm:$0xff]
        %v1757 = vld [vmem:[#allocation13 + $0x1f8] sm:$0xff]
        %v1758 = vld [vmem:[#allocation13 + $0x200] sm:$0xff]
        %v1759 = vld [vmem:[#allocation13 + $0x208] sm:$0xff]
        %v1760 = vld [vmem:[#allocation13 + $0x210] sm:$0xff]
        %v1761 = vld [vmem:[#allocation13 + $0x218] sm:$0xff]
        %v1762 = vld [vmem:[#allocation13 + $0x220] sm:$0xff]
        %v1763 = vld [vmem:[#allocation13 + $0x228] sm:$0xff]
        %v1764 = vld [vmem:[#allocation13 + $0x230] sm:$0xff]
        %v1765 = vld [vmem:[#allocation13 + $0x238] sm:$0xff]
        %v1766 = vld [vmem:[#allocation13 + $0x240] sm:$0xff]
        %v1767 = vld [vmem:[#allocation13 + $0x248] sm:$0xff]
        %v1768 = vld [vmem:[#allocation13 + $0x250] sm:$0xff]
        %v1769 = vld [vmem:[#allocation13 + $0x258] sm:$0xff]
        %v1770 = vld [vmem:[#allocation13 + $0x260] sm:$0xff]
        %v1771 = vld [vmem:[#allocation13 + $0x268] sm:$0xff]
        %v1772 = vld [vmem:[#allocation13 + $0x270] sm:$0xff]
        %v1773 = vld [vmem:[#allocation13 + $0x278] sm:$0xff]
        %v1774 = vld [vmem:[#allocation13 + $0x280] sm:$0xff]
        %v1775 = vld [vmem:[#allocation13 + $0x288] sm:$0xff]
        %v1776 = vld [vmem:[#allocation13 + $0x290] sm:$0xff]
        %v1777 = vld [vmem:[#allocation13 + $0x298] sm:$0xff]
        %v1778 = vld [vmem:[#allocation13 + $0x2a0] sm:$0xff]
        %v1779 = vld [vmem:[#allocation13 + $0x2a8] sm:$0xff]
        %v1780 = vld [vmem:[#allocation13 + $0x2b0] sm:$0xff]
        %v1781 = vld [vmem:[#allocation13 + $0x2b8] sm:$0xff]
        %v1782 = vld [vmem:[#allocation13 + $0x2c0] sm:$0xff]
        %v1783 = vld [vmem:[#allocation13 + $0x2c8] sm:$0xff]
        %v1784 = vld [vmem:[#allocation13 + $0x2d0] sm:$0xff]
        %v1785 = vld [vmem:[#allocation13 + $0x2d8] sm:$0xff]
        %v1786 = vld [vmem:[#allocation13 + $0x2e0] sm:$0xff]
        %v1787 = vld [vmem:[#allocation13 + $0x2e8] sm:$0xff]
        %v1788 = vld [vmem:[#allocation13 + $0x2f0] sm:$0xff]
        %v1789 = vld [vmem:[#allocation13 + $0x2f8] sm:$0xff]
        %v1790 = vld [vmem:[%s14] sm:$0x3f]
        %v1792 = vlaneseq
        %v1793 = vshrl.u32 %v1792, 7
        %v1794 = vsub.s32 0, %v1793
        %v1795 = vrot.slane %v1790, %v1794
        %v1796 = vlaneseq
        %v1797 = vshrl.u32 %v1796, 7
        %v1798 = vsub.s32 1, %v1797
        %v1799 = vrot.slane %v1790, %v1798
        %v1800 = vlaneseq
        %v1801 = vshrl.u32 %v1800, 7
        %v1802 = vsub.s32 2, %v1801
        %v1803 = vrot.slane %v1790, %v1802
        %v1804 = vlaneseq
        %v1805 = vshrl.u32 %v1804, 7
        %v1806 = vsub.s32 3, %v1805
        %v1807 = vrot.slane %v1790, %v1806
        %v1808 = vlaneseq
        %v1809 = vshrl.u32 %v1808, 7
        %v1810 = vsub.s32 4, %v1809
        %v1811 = vrot.slane %v1790, %v1810
        %v1812 = vlaneseq
        %v1813 = vshrl.u32 %v1812, 7
        %v1814 = vsub.s32 5, %v1813
        %v1815 = vrot.slane %v1790, %v1814
        %v1918 = vunpack.c.l.b16 %v1694
        %v1919 = vunpack.c.h.b16 %v1694
        %v1920 = vunpack.c.l.b16 %v1695
        %v1921 = vunpack.c.h.b16 %v1695
        %v1922 = vunpack.c.l.b16 %v1696
        %v1923 = vunpack.c.h.b16 %v1696
        %v1924 = vunpack.c.l.b16 %v1697
        %v1925 = vunpack.c.h.b16 %v1697
        %v1926 = vunpack.c.l.b16 %v1698
        %v1927 = vunpack.c.h.b16 %v1698
        %v1928 = vunpack.c.l.b16 %v1699
        %v1929 = vunpack.c.h.b16 %v1699
        %v1930 = vunpack.c.l.b16 %v1700
        %v1931 = vunpack.c.h.b16 %v1700
        %v1932 = vunpack.c.l.b16 %v1701
        %v1933 = vunpack.c.h.b16 %v1701
        %v1934 = vunpack.c.l.b16 %v1702
        %v1935 = vunpack.c.h.b16 %v1702
        %v1936 = vunpack.c.l.b16 %v1703
        %v1937 = vunpack.c.h.b16 %v1703
        %v1938 = vunpack.c.l.b16 %v1704
        %v1939 = vunpack.c.h.b16 %v1704
        %v1940 = vunpack.c.l.b16 %v1705
        %v1941 = vunpack.c.h.b16 %v1705
        %v1942 = vunpack.c.l.b16 %v1706
        %v1943 = vunpack.c.h.b16 %v1706
        %v1944 = vunpack.c.l.b16 %v1707
        %v1945 = vunpack.c.h.b16 %v1707
        %v1946 = vunpack.c.l.b16 %v1708
        %v1947 = vunpack.c.h.b16 %v1708
        %v1948 = vunpack.c.l.b16 %v1709
        %v1949 = vunpack.c.h.b16 %v1709
        %v1950 = vunpack.c.l.b16 %v1710
        %v1951 = vunpack.c.h.b16 %v1710
        %v1952 = vunpack.c.l.b16 %v1711
        %v1953 = vunpack.c.h.b16 %v1711
        %v1954 = vunpack.c.l.b16 %v1712
        %v1955 = vunpack.c.h.b16 %v1712
        %v1956 = vunpack.c.l.b16 %v1713
        %v1957 = vunpack.c.h.b16 %v1713
        %v1958 = vunpack.c.l.b16 %v1714
        %v1959 = vunpack.c.h.b16 %v1714
        %v1960 = vunpack.c.l.b16 %v1715
        %v1961 = vunpack.c.h.b16 %v1715
        %v1962 = vunpack.c.l.b16 %v1716
        %v1963 = vunpack.c.h.b16 %v1716
        %v1964 = vunpack.c.l.b16 %v1717
        %v1965 = vunpack.c.h.b16 %v1717
        %v1966 = vunpack.c.l.b16 %v1718
        %v1967 = vunpack.c.h.b16 %v1718
        %v1968 = vunpack.c.l.b16 %v1719
        %v1969 = vunpack.c.h.b16 %v1719
        %v1970 = vunpack.c.l.b16 %v1720
        %v1971 = vunpack.c.h.b16 %v1720
        %v1972 = vunpack.c.l.b16 %v1721
        %v1973 = vunpack.c.h.b16 %v1721
        %v1974 = vunpack.c.l.b16 %v1722
        %v1975 = vunpack.c.h.b16 %v1722
        %v1976 = vunpack.c.l.b16 %v1723
        %v1977 = vunpack.c.h.b16 %v1723
        %v1978 = vunpack.c.l.b16 %v1724
        %v1979 = vunpack.c.h.b16 %v1724
        %v1980 = vunpack.c.l.b16 %v1725
        %v1981 = vunpack.c.h.b16 %v1725
        %v1982 = vunpack.c.l.b16 %v1726
        %v1983 = vunpack.c.h.b16 %v1726
        %v1984 = vunpack.c.l.b16 %v1727
        %v1985 = vunpack.c.h.b16 %v1727
        %v1986 = vunpack.c.l.b16 %v1728
        %v1987 = vunpack.c.h.b16 %v1728
        %v1988 = vunpack.c.l.b16 %v1729
        %v1989 = vunpack.c.h.b16 %v1729
        %v1990 = vunpack.c.l.b16 %v1730
        %v1991 = vunpack.c.h.b16 %v1730
        %v1992 = vunpack.c.l.b16 %v1731
        %v1993 = vunpack.c.h.b16 %v1731
        %v1994 = vunpack.c.l.b16 %v1732
        %v1995 = vunpack.c.h.b16 %v1732
        %v1996 = vunpack.c.l.b16 %v1733
        %v1997 = vunpack.c.h.b16 %v1733
        %v1998 = vunpack.c.l.b16 %v1734
        %v1999 = vunpack.c.h.b16 %v1734
        %v2000 = vunpack.c.l.b16 %v1735
        %v2001 = vunpack.c.h.b16 %v1735
        %v2002 = vunpack.c.l.b16 %v1736
        %v2003 = vunpack.c.h.b16 %v1736
        %v2004 = vunpack.c.l.b16 %v1737
        %v2005 = vunpack.c.h.b16 %v1737
        %v2006 = vunpack.c.l.b16 %v1738
        %v2007 = vunpack.c.h.b16 %v1738
        %v2008 = vunpack.c.l.b16 %v1739
        %v2009 = vunpack.c.h.b16 %v1739
        %v2010 = vunpack.c.l.b16 %v1740
        %v2011 = vunpack.c.h.b16 %v1740
        %v2012 = vunpack.c.l.b16 %v1741
        %v2013 = vunpack.c.h.b16 %v1741
        %v2014 = vunpack.c.l.b16 %v1742
        %v2015 = vunpack.c.h.b16 %v1742
        %v2016 = vunpack.c.l.b16 %v1743
        %v2017 = vunpack.c.h.b16 %v1743
        %v2018 = vunpack.c.l.b16 %v1744
        %v2019 = vunpack.c.h.b16 %v1744
        %v2020 = vunpack.c.l.b16 %v1745
        %v2021 = vunpack.c.h.b16 %v1745
        %v2022 = vunpack.c.l.b16 %v1746
        %v2023 = vunpack.c.h.b16 %v1746
        %v2024 = vunpack.c.l.b16 %v1747
        %v2025 = vunpack.c.h.b16 %v1747
        %v2026 = vunpack.c.l.b16 %v1748
        %v2027 = vunpack.c.h.b16 %v1748
        %v2028 = vunpack.c.l.b16 %v1749
        %v2029 = vunpack.c.h.b16 %v1749
        %v2030 = vunpack.c.l.b16 %v1750
        %v2031 = vunpack.c.h.b16 %v1750
        %v2032 = vunpack.c.l.b16 %v1751
        %v2033 = vunpack.c.h.b16 %v1751
        %v2034 = vunpack.c.l.b16 %v1752
        %v2035 = vunpack.c.h.b16 %v1752
        %v2036 = vunpack.c.l.b16 %v1753
        %v2037 = vunpack.c.h.b16 %v1753
        %v2038 = vunpack.c.l.b16 %v1754
        %v2039 = vunpack.c.h.b16 %v1754
        %v2040 = vunpack.c.l.b16 %v1755
        %v2041 = vunpack.c.h.b16 %v1755
        %v2042 = vunpack.c.l.b16 %v1756
        %v2043 = vunpack.c.h.b16 %v1756
        %v2044 = vunpack.c.l.b16 %v1757
        %v2045 = vunpack.c.h.b16 %v1757
        %v2046 = vunpack.c.l.b16 %v1758
        %v2047 = vunpack.c.h.b16 %v1758
        %v2048 = vunpack.c.l.b16 %v1759
        %v2049 = vunpack.c.h.b16 %v1759
        %v2050 = vunpack.c.l.b16 %v1760
        %v2051 = vunpack.c.h.b16 %v1760
        %v2052 = vunpack.c.l.b16 %v1761
        %v2053 = vunpack.c.h.b16 %v1761
        %v2054 = vunpack.c.l.b16 %v1762
        %v2055 = vunpack.c.h.b16 %v1762
        %v2056 = vunpack.c.l.b16 %v1763
        %v2057 = vunpack.c.h.b16 %v1763
        %v2058 = vunpack.c.l.b16 %v1764
        %v2059 = vunpack.c.h.b16 %v1764
        %v2060 = vunpack.c.l.b16 %v1765
        %v2061 = vunpack.c.h.b16 %v1765
        %v2062 = vunpack.c.l.b16 %v1766
        %v2063 = vunpack.c.h.b16 %v1766
        %v2064 = vunpack.c.l.b16 %v1767
        %v2065 = vunpack.c.h.b16 %v1767
        %v2066 = vunpack.c.l.b16 %v1768
        %v2067 = vunpack.c.h.b16 %v1768
        %v2068 = vunpack.c.l.b16 %v1769
        %v2069 = vunpack.c.h.b16 %v1769
        %v2070 = vunpack.c.l.b16 %v1770
        %v2071 = vunpack.c.h.b16 %v1770
        %v2072 = vunpack.c.l.b16 %v1771
        %v2073 = vunpack.c.h.b16 %v1771
        %v2074 = vunpack.c.l.b16 %v1772
        %v2075 = vunpack.c.h.b16 %v1772
        %v2076 = vunpack.c.l.b16 %v1773
        %v2077 = vunpack.c.h.b16 %v1773
        %v2078 = vunpack.c.l.b16 %v1774
        %v2079 = vunpack.c.h.b16 %v1774
        %v2080 = vunpack.c.l.b16 %v1775
        %v2081 = vunpack.c.h.b16 %v1775
        %v2082 = vunpack.c.l.b16 %v1776
        %v2083 = vunpack.c.h.b16 %v1776
        %v2084 = vunpack.c.l.b16 %v1777
        %v2085 = vunpack.c.h.b16 %v1777
        %v2086 = vunpack.c.l.b16 %v1778
        %v2087 = vunpack.c.h.b16 %v1778
        %v2088 = vunpack.c.l.b16 %v1779
        %v2089 = vunpack.c.h.b16 %v1779
        %v2090 = vunpack.c.l.b16 %v1780
        %v2091 = vunpack.c.h.b16 %v1780
        %v2092 = vunpack.c.l.b16 %v1781
        %v2093 = vunpack.c.h.b16 %v1781
        %v2094 = vunpack.c.l.b16 %v1782
        %v2095 = vunpack.c.h.b16 %v1782
        %v2096 = vunpack.c.l.b16 %v1783
        %v2097 = vunpack.c.h.b16 %v1783
        %v2098 = vunpack.c.l.b16 %v1784
        %v2099 = vunpack.c.h.b16 %v1784
        %v2100 = vunpack.c.l.b16 %v1785
        %v2101 = vunpack.c.h.b16 %v1785
        %v2102 = vunpack.c.l.b16 %v1786
        %v2103 = vunpack.c.h.b16 %v1786
        %v2104 = vunpack.c.l.b16 %v1787
        %v2105 = vunpack.c.h.b16 %v1787
        %v2106 = vunpack.c.l.b16 %v1788
        %v2107 = vunpack.c.h.b16 %v1788
        %v2108 = vunpack.c.l.b16 %v1789
        %v2109 = vunpack.c.h.b16 %v1789
        %v2110 = vpack.c.b16 %v1924, %v1918
        %v2111 = vpack.c.b16 %v1925, %v1919
        %v2112 = vpack.c.b16 %v1926, %v1920
        %v2113 = vpack.c.b16 %v1927, %v1921
        %v2114 = vpack.c.b16 %v1928, %v1922
        %v2115 = vpack.c.b16 %v1929, %v1923
        %v2116 = vpack.c.b16 %v1936, %v1930
        %v2117 = vpack.c.b16 %v1937, %v1931
        %v2118 = vpack.c.b16 %v1938, %v1932
        %v2119 = vpack.c.b16 %v1939, %v1933
        %v2120 = vpack.c.b16 %v1940, %v1934
        %v2121 = vpack.c.b16 %v1941, %v1935
        %v2122 = vpack.c.b16 %v1948, %v1942
        %v2123 = vpack.c.b16 %v1949, %v1943
        %v2124 = vpack.c.b16 %v1950, %v1944
        %v2125 = vpack.c.b16 %v1951, %v1945
        %v2126 = vpack.c.b16 %v1952, %v1946
        %v2127 = vpack.c.b16 %v1953, %v1947
        %v2128 = vpack.c.b16 %v1960, %v1954
        %v2129 = vpack.c.b16 %v1961, %v1955
        %v2130 = vpack.c.b16 %v1962, %v1956
        %v2131 = vpack.c.b16 %v1963, %v1957
        %v2132 = vpack.c.b16 %v1964, %v1958
        %v2133 = vpack.c.b16 %v1965, %v1959
        %v2134 = vpack.c.b16 %v1972, %v1966
        %v2135 = vpack.c.b16 %v1973, %v1967
        %v2136 = vpack.c.b16 %v1974, %v1968
        %v2137 = vpack.c.b16 %v1975, %v1969
        %v2138 = vpack.c.b16 %v1976, %v1970
        %v2139 = vpack.c.b16 %v1977, %v1971
        %v2140 = vpack.c.b16 %v1984, %v1978
        %v2141 = vpack.c.b16 %v1985, %v1979
        %v2142 = vpack.c.b16 %v1986, %v1980
        %v2143 = vpack.c.b16 %v1987, %v1981
        %v2144 = vpack.c.b16 %v1988, %v1982
        %v2145 = vpack.c.b16 %v1989, %v1983
        %v2146 = vpack.c.b16 %v1996, %v1990
        %v2147 = vpack.c.b16 %v1997, %v1991
        %v2148 = vpack.c.b16 %v1998, %v1992
        %v2149 = vpack.c.b16 %v1999, %v1993
        %v2150 = vpack.c.b16 %v2000, %v1994
        %v2151 = vpack.c.b16 %v2001, %v1995
        %v2152 = vpack.c.b16 %v2008, %v2002
        %v2153 = vpack.c.b16 %v2009, %v2003
        %v2154 = vpack.c.b16 %v2010, %v2004
        %v2155 = vpack.c.b16 %v2011, %v2005
        %v2156 = vpack.c.b16 %v2012, %v2006
        %v2157 = vpack.c.b16 %v2013, %v2007
        %v2158 = vpack.c.b16 %v2020, %v2014
        %v2159 = vpack.c.b16 %v2021, %v2015
        %v2160 = vpack.c.b16 %v2022, %v2016
        %v2161 = vpack.c.b16 %v2023, %v2017
        %v2162 = vpack.c.b16 %v2024, %v2018
        %v2163 = vpack.c.b16 %v2025, %v2019
        %v2164 = vpack.c.b16 %v2032, %v2026
        %v2165 = vpack.c.b16 %v2033, %v2027
        %v2166 = vpack.c.b16 %v2034, %v2028
        %v2167 = vpack.c.b16 %v2035, %v2029
        %v2168 = vpack.c.b16 %v2036, %v2030
        %v2169 = vpack.c.b16 %v2037, %v2031
        %v2170 = vpack.c.b16 %v2044, %v2038
        %v2171 = vpack.c.b16 %v2045, %v2039
        %v2172 = vpack.c.b16 %v2046, %v2040
        %v2173 = vpack.c.b16 %v2047, %v2041
        %v2174 = vpack.c.b16 %v2048, %v2042
        %v2175 = vpack.c.b16 %v2049, %v2043
        %v2176 = vpack.c.b16 %v2056, %v2050
        %v2177 = vpack.c.b16 %v2057, %v2051
        %v2178 = vpack.c.b16 %v2058, %v2052
        %v2179 = vpack.c.b16 %v2059, %v2053
        %v2180 = vpack.c.b16 %v2060, %v2054
        %v2181 = vpack.c.b16 %v2061, %v2055
        %v2182 = vpack.c.b16 %v2068, %v2062
        %v2183 = vpack.c.b16 %v2069, %v2063
        %v2184 = vpack.c.b16 %v2070, %v2064
        %v2185 = vpack.c.b16 %v2071, %v2065
        %v2186 = vpack.c.b16 %v2072, %v2066
        %v2187 = vpack.c.b16 %v2073, %v2067
        %v2188 = vpack.c.b16 %v2080, %v2074
        %v2189 = vpack.c.b16 %v2081, %v2075
        %v2190 = vpack.c.b16 %v2082, %v2076
        %v2191 = vpack.c.b16 %v2083, %v2077
        %v2192 = vpack.c.b16 %v2084, %v2078
        %v2193 = vpack.c.b16 %v2085, %v2079
        %v2194 = vpack.c.b16 %v2092, %v2086
        %v2195 = vpack.c.b16 %v2093, %v2087
        %v2196 = vpack.c.b16 %v2094, %v2088
        %v2197 = vpack.c.b16 %v2095, %v2089
        %v2198 = vpack.c.b16 %v2096, %v2090
        %v2199 = vpack.c.b16 %v2097, %v2091
        %v2200 = vpack.c.b16 %v2104, %v2098
        %v2201 = vpack.c.b16 %v2105, %v2099
        %v2202 = vpack.c.b16 %v2106, %v2100
        %v2203 = vpack.c.b16 %v2107, %v2101
        %v2204 = vpack.c.b16 %v2108, %v2102
        %v2205 = vpack.c.b16 %v2109, %v2103
        %2302 = vmatprep.subr.bf16.mxu0 %v2111
        %2303 = vmatpush1.bf16.msra.mxu0 %v2110
        %2304 = vmatprep.subr.bf16.mxu0 %v2117
        %2305 = vmatpush1.bf16.msra.mxu0 %v2116
        %2306 = vmatprep.subr.bf16.mxu0 %v2123
        %2307 = vmatpush1.bf16.msra.mxu0 %v2122
        %2308 = vmatprep.subr.bf16.mxu0 %v2129
        %2309 = vmatpush1.bf16.msra.mxu0 %v2128
        %2310 = vmatprep.subr.bf16.mxu0 %v2135
        %2311 = vmatpush1.bf16.msra.mxu0 %v2134
        %2312 = vmatprep.subr.bf16.mxu0 %v2141
        %2313 = vmatpush1.bf16.msra.mxu0 %v2140
        %2314 = vmatprep.subr.bf16.mxu0 %v2147
        %2315 = vmatpush1.bf16.msra.mxu0 %v2146
        %2316 = vmatprep.subr.bf16.mxu0 %v2153
        %2317 = vmatpush1.bf16.msra.mxu0 %v2152
        %2318 = vmatprep.subr.bf16.mxu0 %v2159
        %2319 = vmatpush1.bf16.msra.mxu0 %v2158
        %2320 = vmatprep.subr.bf16.mxu0 %v2165
        %2321 = vmatpush1.bf16.msra.mxu0 %v2164
        %2322 = vmatprep.subr.bf16.mxu0 %v2171
        %2323 = vmatpush1.bf16.msra.mxu0 %v2170
        %2324 = vmatprep.subr.bf16.mxu0 %v2177
        %2325 = vmatpush1.bf16.msra.mxu0 %v2176
        %2326 = vmatprep.subr.bf16.mxu0 %v2183
        %2327 = vmatpush1.bf16.msra.mxu0 %v2182
        %2328 = vmatprep.subr.bf16.mxu0 %v2189
        %2329 = vmatpush1.bf16.msra.mxu0 %v2188
        %2330 = vmatprep.subr.bf16.mxu0 %v2195
        %2331 = vmatpush1.bf16.msra.mxu0 %v2194
        %2332 = vmatprep.subr.bf16.mxu0 %v2201
        %2333 = vmatpush1.bf16.msra.mxu0 %v2200
        %2334 = vmatprep.mubr.bf16.mxu0 %v1693
        %2335 = vmatmul.mubr.bf16.gmra.mrb[0].mxu0 %v1692
        %v2336 = vpop.f32.mrb[0].mxu0
        %v2337 = vadd.f32 %v1795, %v2336
        %v2338 = vpop.f32.mrb[0].mxu0
        %v2339 = vadd.f32 %v1799, %v2338
        %v2340 = vpop.f32.mrb[0].mxu0
        %v2341 = vpop.f32.mrb[0].mxu0
        %2342 = vdwg.mxu0
        %2343 = vmatprep.subr.bf16.mxu0 %v2113
        %2344 = vmatpush1.bf16.msra.mxu0 %v2112
        %2345 = vmatprep.subr.bf16.mxu0 %v2119
        %2346 = vmatpush1.bf16.msra.mxu0 %v2118
        %2347 = vmatprep.subr.bf16.mxu0 %v2125
        %2348 = vmatpush1.bf16.msra.mxu0 %v2124
        %2349 = vmatprep.subr.bf16.mxu0 %v2131
        %2350 = vmatpush1.bf16.msra.mxu0 %v2130
        %2351 = vmatprep.subr.bf16.mxu0 %v2137
        %2352 = vmatpush1.bf16.msra.mxu0 %v2136
        %2353 = vmatprep.subr.bf16.mxu0 %v2143
        %2354 = vmatpush1.bf16.msra.mxu0 %v2142
        %2355 = vmatprep.subr.bf16.mxu0 %v2149
        %2356 = vmatpush1.bf16.msra.mxu0 %v2148
        %2357 = vmatprep.subr.bf16.mxu0 %v2155
        %2358 = vmatpush1.bf16.msra.mxu0 %v2154
        %2359 = vmatprep.subr.bf16.mxu0 %v2161
        %2360 = vmatpush1.bf16.msra.mxu0 %v2160
        %2361 = vmatprep.subr.bf16.mxu0 %v2167
        %2362 = vmatpush1.bf16.msra.mxu0 %v2166
        %2363 = vmatprep.subr.bf16.mxu0 %v2173
        %2364 = vmatpush1.bf16.msra.mxu0 %v2172
        %2365 = vmatprep.subr.bf16.mxu0 %v2179
        %2366 = vmatpush1.bf16.msra.mxu0 %v2178
        %2367 = vmatprep.subr.bf16.mxu0 %v2185
        %2368 = vmatpush1.bf16.msra.mxu0 %v2184
        %2369 = vmatprep.subr.bf16.mxu0 %v2191
        %2370 = vmatpush1.bf16.msra.mxu0 %v2190
        %2371 = vmatprep.subr.bf16.mxu0 %v2197
        %2372 = vmatpush1.bf16.msra.mxu0 %v2196
        %2373 = vmatprep.subr.bf16.mxu0 %v2203
        %2374 = vmatpush1.bf16.msra.mxu0 %v2202
        %2375 = vmatprep.mubr.bf16.mxu0 %v1693
        %2376 = vmatmul.mubr.bf16.gmra.mrb[0].mxu0 %v1692
        %v2377 = vpop.f32.mrb[0].mxu0
        %v2378 = vadd.f32 %v1803, %v2377
        %v2379 = vpop.f32.mrb[0].mxu0
        %v2380 = vadd.f32 %v1807, %v2379
        %v2381 = vpop.f32.mrb[0].mxu0
        %v2382 = vpop.f32.mrb[0].mxu0
        %2383 = vdwg.mxu0
        %2384 = vmatprep.subr.bf16.mxu0 %v2115
        %2385 = vmatpush1.bf16.msra.mxu0 %v2114
        %2386 = vmatprep.subr.bf16.mxu0 %v2121
        %2387 = vmatpush1.bf16.msra.mxu0 %v2120
        %2388 = vmatprep.subr.bf16.mxu0 %v2127
        %2389 = vmatpush1.bf16.msra.mxu0 %v2126
        %2390 = vmatprep.subr.bf16.mxu0 %v2133
        %2391 = vmatpush1.bf16.msra.mxu0 %v2132
        %2392 = vmatprep.subr.bf16.mxu0 %v2139
        %2393 = vmatpush1.bf16.msra.mxu0 %v2138
        %2394 = vmatprep.subr.bf16.mxu0 %v2145
        %2395 = vmatpush1.bf16.msra.mxu0 %v2144
        %2396 = vmatprep.subr.bf16.mxu0 %v2151
        %2397 = vmatpush1.bf16.msra.mxu0 %v2150
        %2398 = vmatprep.subr.bf16.mxu0 %v2157
        %2399 = vmatpush1.bf16.msra.mxu0 %v2156
        %2400 = vmatprep.subr.bf16.mxu0 %v2163
        %2401 = vmatpush1.bf16.msra.mxu0 %v2162
        %2402 = vmatprep.subr.bf16.mxu0 %v2169
        %2403 = vmatpush1.bf16.msra.mxu0 %v2168
        %2404 = vmatprep.subr.bf16.mxu0 %v2175
        %2405 = vmatpush1.bf16.msra.mxu0 %v2174
        %2406 = vmatprep.subr.bf16.mxu0 %v2181
        %2407 = vmatpush1.bf16.msra.mxu0 %v2180
        %2408 = vmatprep.subr.bf16.mxu0 %v2187
        %2409 = vmatpush1.bf16.msra.mxu0 %v2186
        %2410 = vmatprep.subr.bf16.mxu0 %v2193
        %2411 = vmatpush1.bf16.msra.mxu0 %v2192
        %2412 = vmatprep.subr.bf16.mxu0 %v2199
        %2413 = vmatpush1.bf16.msra.mxu0 %v2198
        %2414 = vmatprep.subr.bf16.mxu0 %v2205
        %2415 = vmatpush1.bf16.msra.mxu0 %v2204
        %2416 = vmatprep.mubr.bf16.mxu0 %v1693
        %2417 = vmatmul.mubr.bf16.gmra.mrb[0].mxu0 %v1692
        %v2418 = vpop.f32.mrb[0].mxu0
        %v2419 = vadd.f32 %v1811, %v2418
        %v2420 = vpop.f32.mrb[0].mxu0
        %v2421 = vadd.f32 %v1815, %v2420
        %v2422 = vpop.f32.mrb[0].mxu0
        %v2423 = vpop.f32.mrb[0].mxu0
        %2424 = vdwg.mxu0
        %v2425 = vtanh.pop %v2337
        %v2426 = vtanh.pop %v2339
        %v2427 = vtanh.pop %v2378
        %v2428 = vtanh.pop %v2380
        %v2429 = vtanh.pop %v2419
        %v2430 = vtanh.pop %v2421
        %2431 = vst [vmem:[%s595] sm:$0xff] %v2425
        %2432 = vst [vmem:[%s595 + $0x8] sm:$0xff] %v2426
        %2433 = vst [vmem:[%s595 + $0x10] sm:$0xff] %v2427
        %2434 = vst [vmem:[%s595 + $0x18] sm:$0xff] %v2428
        %2435 = vst [vmem:[%s595 + $0x20] sm:$0xff] %v2429
        %2436 = vst [vmem:[%s595 + $0x28] sm:$0xff] %v2430
        %s2437 = sand.u32 %s363, 1
        %s2438 = scalar_lea.sflag [#allocation4], %s2437
        %s2439 = sand.u32 %s363, 1
        %s2440 = smul.addr %s2439, 48
        %s2441 = scalar_lea.vmem [#allocation14], %s2440
        // Predicated region
        $region109: #{tpu_custom_call.1} parent=79 // pred_check
          %p2442 = pneg %p373
        $region110: #{tpu_custom_call.1} parent=79 // pred_check_branch
          %2444 = sbr.rel (%p2442) target = $region112
        $region111: #{tpu_custom_call.1} parent=79 // pred_region
          %s2446 = ssub.s32 768, 768
          %2447 = vsyncadd %s2438, %s2446
          %s2448 = smul.addr %s35, 6
          %s2449 = smul.addr %s2448, 128
          %s2450 = scalar_lea.hbm %s15, %s2449
          %s2452 = sshll.u32 %s2441, 4
          %s2453 = int_to_ptr.vmem [resolvable:$true] %s2452
          %2455 = dma.vmem_to_hbm [thread:$0]  %s2453, 768, %s2450, %s2438
        $region112: #{tpu_custom_call.1} parent=79 // pred_fallthru
          _
      $region80: #{tpu_custom_call.1} parent=5 // pred_fallthru
        _
      %p2456 = scmp.le.s32.totalorder 2, %s30
      // Predicated region
      $region113: #{tpu_custom_call.1} parent=5 // pred_check
        %p2457 = pneg %p2456
      $region114: #{tpu_custom_call.1} parent=5 // pred_check_branch
        %2459 = sbr.rel (%p2457) target = $region116
      $region115: #{tpu_custom_call.1} parent=5 // pred_region
        %s2460 = ssub.s32 %s30, 2
        // Predicated region
        $region117: #{tpu_custom_call.1} parent=115 // pred_check
          %p2461 = pneg %p379
        $region118: #{tpu_custom_call.1} parent=115 // pred_check_branch
          %2463 = sbr.rel (%p2461) target = $region120
        $region119: #{tpu_custom_call.1} parent=115 // pred_region
          %s2464 = sand.u32 %s364, 1
          %s2465 = scalar_lea.sflag [#allocation4], %s2464
          %s2466 = sand.u32 %s364, 1
          %s2467 = smul.addr %s2466, 48
          %s2468 = scalar_lea.vmem [#allocation14], %s2467
          %2469 = dma.done %s2465, 768
        $region120: #{tpu_custom_call.1} parent=115 // pred_fallthru
          _
      $region116: #{tpu_custom_call.1} parent=5 // pred_fallthru
        _
    $region6: #{tpu_custom_call.1} parent=1 // loop_footer
      %s34 = sadd.s32 1, %s30
    $region7: #{tpu_custom_call.1} parent=1 // loop_footer_branch
      %29 = sbr.rel target = $region3
    $region8: #{tpu_custom_call.1} parent=1 // loop_exit
      _
    %2470 = vsyncpa [#allocation3], 1
    %s2471 = scalar_lea.sflag [#allocation3], 1
    %2472 = vsyncpa %s2471, 1
    %2473 = vsyncpa [#allocation6], 1
    %2474 = vsyncpa [#allocation9], 1
    %2475 = vsyncpa [#allocation12], 1
    %2476 = vsyncpa [#allocation4], 1
    %s2477 = scalar_lea.sflag [#allocation4], 1
    %2478 = vsyncpa %s2477, 1

</llo_original>
